<compile_context>
chip_gen: v7x
topology: tpu7x:2x2x1
jax: 0.10.0
libtpu: 0.0.40
codegen_flags: <defaults>
</compile_context>

<pallas_src>
import functools

import jax
import jax.numpy as jnp
from jax import lax
from jax.experimental import pallas as pl
from jax.experimental.pallas import tpu as pltpu


def _round_up(x, m):
    return ((x + m - 1) // m) * m


def _sl(start, size, step):
    """Static slice helper: strided pl.ds only when step > 1."""
    return pl.ds(start, size) if step == 1 else pl.ds(start, size, stride=step)


# ---------------------------------------------------------------------------
# Fused Pallas kernel (whole RegNet unit, grid over batch images)
# ---------------------------------------------------------------------------

def _fused_regnet_unit(x, w1, b1, w2, b2, w3, bf, wi, *, stride, resize,
                       H, W, Cin, Cmid, Cout, Ho, Wo):
    N = x.shape[0]
    Hp = H + 2                              # h1 scratch height (1-px pad ring)
    Wpp = _round_up(W + 2, 8)               # sublane-aligned padded width
    f32 = jnp.float32
    bf16 = jnp.bfloat16

    def kernel(*refs):
        if resize:
            (x_ref, w1_ref, b1_ref, w2_ref, b2_ref, w3_ref, bf_ref, wi_ref,
             o_ref, h1_ref) = refs
        else:
            (x_ref, w1_ref, b1_ref, w2_ref, b2_ref, w3_ref, bf_ref,
             o_ref, h1_ref) = refs

        # ---- conv1: 1x1 + folded BN + ReLU, interior pixels only ----------
        xv = x_ref[...]                                   # (H, W, Cin) f32
        x2d = xv.reshape(H * W, Cin).astype(bf16)
        h1 = jnp.dot(x2d, w1_ref[...], preferred_element_type=f32)
        h1 = jnp.maximum(h1 + b1_ref[...], 0.0)

        # zero only the pad ring of the VMEM-resident h1 buffer (acts as the
        # conv2 "same" zero padding of h1), then drop the interior in place.
        h1_ref[0:1, :, :] = jnp.zeros((1, Wpp, Cmid), f32)
        h1_ref[H + 1:H + 2, :, :] = jnp.zeros((1, Wpp, Cmid), f32)
        h1_ref[:, 0:1, :] = jnp.zeros((Hp, 1, Cmid), f32)
        h1_ref[:, W + 1:Wpp, :] = jnp.zeros((Hp, Wpp - W - 1, Cmid), f32)
        h1_ref[1:H + 1, 1:W + 1, :] = h1.reshape(H, W, Cmid)

        # ---- conv2: 3x3 stride-s + folded BN + ReLU ------------------------
        # taps come straight out of VMEM-resident padded h1 (no HBM im2col)
        acc = jnp.zeros((Ho * Wo, Cmid), f32)
        for kh in range(3):
            for kw in range(3):
                tap = h1_ref[_sl(kh, Ho, stride), _sl(kw, Wo, stride), :]
                tap = tap.reshape(Ho * Wo, Cmid).astype(bf16)
                acc = acc + jnp.dot(tap, w2_ref[kh * 3 + kw],
                                    preferred_element_type=f32)
        h2 = jnp.maximum(acc + b2_ref[...], 0.0).astype(bf16)

        # ---- conv3 (1x1, no act) + identity branch + residual + ReLU -------
        y = jnp.dot(h2, w3_ref[...], preferred_element_type=f32)
        if resize:
            # identity 1x1 conv: strided taps of x, read in place from VMEM
            xs = xv if stride == 1 else \
                x_ref[_sl(0, Ho, stride), _sl(0, Wo, stride), :]
            xs = xs.reshape(Ho * Wo, Cin).astype(bf16)
            y = y + jnp.dot(xs, wi_ref[...], preferred_element_type=f32)
        else:
            # identity = x exactly (f32, no matmul)
            y = y + xv.reshape(Ho * Wo, Cout)
        y = jnp.maximum(y + bf_ref[...], 0.0)
        o_ref[...] = y.reshape(Ho, Wo, Cout).astype(o_ref.dtype)

    in_specs = [
        pl.BlockSpec((None, H, W, Cin), lambda n: (n, 0, 0, 0)),
        pl.BlockSpec((Cin, Cmid), lambda n: (0, 0)),
        pl.BlockSpec((1, Cmid), lambda n: (0, 0)),
        pl.BlockSpec((9, Cmid, Cmid), lambda n: (0, 0, 0)),
        pl.BlockSpec((1, Cmid), lambda n: (0, 0)),
        pl.BlockSpec((Cmid, Cout), lambda n: (0, 0)),
        pl.BlockSpec((1, Cout), lambda n: (0, 0)),
    ]
    inputs = [x, w1, b1, w2, b2, w3, bf]
    if resize:
        in_specs.append(pl.BlockSpec((Cin, Cout), lambda n: (0, 0)))
        inputs.append(wi)

    return pl.pallas_call(
        kernel,
        out_shape=jax.ShapeDtypeStruct((N, Ho, Wo, Cout), jnp.float32),
        grid=(N,),
        in_specs=in_specs,
        out_specs=pl.BlockSpec((None, Ho, Wo, Cout), lambda n: (n, 0, 0, 0)),
        scratch_shapes=[pltpu.VMEM((Hp, Wpp, Cmid), jnp.float32)],
        compiler_params=pltpu.CompilerParams(
            dimension_semantics=("parallel",)),
    )(*inputs)


# ---------------------------------------------------------------------------
# RegNetUnit forward (wrapper: layout / BN-fold glue in plain JAX)
# ---------------------------------------------------------------------------

def regnet_unit_forward(x_nchw, params, *, stride):
    N, Cin, H, W = x_nchw.shape
    Cmid = params["w1"].shape[1]
    Cout = params["w3"].shape[1]
    resize = (Cin != Cout) or (stride != 1)
    Ho = (H - 1) // stride + 1
    Wo = (W - 1) // stride + 1

    bf16 = jnp.bfloat16
    # x stays f32 (single HBM read; exact identity add in the no-resize case;
    # the conv dots cast to bf16 inside the kernel).
    x = jnp.transpose(x_nchw, (0, 2, 3, 1)).astype(jnp.float32)  # NCHW -> NHWC

    w1 = params["w1"].astype(bf16)
    b1 = params["b1"].reshape(1, -1).astype(jnp.float32)
    w2 = params["w2"].reshape(9, Cmid, Cmid).astype(bf16)        # HWIO -> taps
    b2 = params["b2"].reshape(1, -1).astype(jnp.float32)
    w3 = params["w3"].astype(bf16)
    if resize:
        wi = params["wi"].astype(bf16)
        bfin = (params["b3"] + params["bi"]).reshape(1, -1).astype(jnp.float32)
    else:
        wi = None
        bfin = params["b3"].reshape(1, -1).astype(jnp.float32)

    out = _fused_regnet_unit(x, w1, b1, w2, b2, w3, bfin, wi,
                             stride=stride, resize=resize, H=H, W=W,
                             Cin=Cin, Cmid=Cmid, Cout=Cout, Ho=Ho, Wo=Wo)
    return jnp.transpose(out, (0, 3, 1, 2))                      # NHWC -> NCHW


# ---------------------------------------------------------------------------
# Deterministic parameter construction (conv weights + folded eval-mode BN)
# ---------------------------------------------------------------------------

def _fold_bn(w, gamma, beta, mean, var, eps=1e-5):
    scale = gamma / jnp.sqrt(var + eps)
    return w * scale, beta - mean * scale


def make_params(key, in_channels, out_channels, bottleneck_factor=4):
    mid = out_channels // bottleneck_factor
    keys = jax.random.split(key, 16)

    def conv_bn(kw, kg, kb, km, kv, shape, c_out):
        w = jax.random.normal(kw, shape, jnp.float32) * 0.1
        gamma = jax.random.uniform(kg, (c_out,), jnp.float32, 0.5, 1.5)
        beta = jax.random.normal(kb, (c_out,), jnp.float32) * 0.1
        mean = jax.random.normal(km, (c_out,), jnp.float32) * 0.1
        var = jax.random.uniform(kv, (c_out,), jnp.float32, 0.5, 1.5)
        return _fold_bn(w, gamma, beta, mean, var)

    w1, b1 = conv_bn(*keys[0:5], shape=(in_channels, mid), c_out=mid)
    w2, b2 = conv_bn(*keys[5:10], shape=(3, 3, mid, mid), c_out=mid)   # HWIO
    w3, b3 = conv_bn(*keys[10:15], shape=(mid, out_channels),
                     c_out=out_channels)
    wi, bi = conv_bn(*jax.random.split(keys[15], 5),
                     shape=(in_channels, out_channels), c_out=out_channels)
    return dict(w1=w1, b1=b1, w2=w2, b2=b2, w3=w3, b3=b3, wi=wi, bi=bi)


# ---------------------------------------------------------------------------
# Pure-JAX reference (for correctness check)
# ---------------------------------------------------------------------------

def regnet_unit_reference(x_nchw, p, *, stride):
    x = jnp.transpose(x_nchw, (0, 2, 3, 1))
    Cin = x.shape[-1]
    Cmid = p["w1"].shape[1]
    Cout = p["w3"].shape[1]
    dn = ("NHWC", "HWIO", "NHWC")
    hp = lax.Precision.HIGHEST

    h1 = jax.nn.relu(lax.conv_general_dilated(
        x, p["w1"].reshape(1, 1, Cin, Cmid), (1, 1), "VALID",
        dimension_numbers=dn, precision=hp) + p["b1"])
    h2 = jax.nn.relu(lax.conv_general_dilated(
        h1, p["w2"], (stride, stride), ((1, 1), (1, 1)),
        dimension_numbers=dn, precision=hp) + p["b2"])
    h3 = lax.conv_general_dilated(
        h2, p["w3"].reshape(1, 1, Cmid, Cout), (1, 1), "VALID",
        dimension_numbers=dn, precision=hp) + p["b3"]
    if Cin != Cout or stride != 1:
        iden = lax.conv_general_dilated(
            x, p["wi"].reshape(1, 1, Cin, Cout), (stride, stride), "VALID",
            dimension_numbers=dn, precision=hp) + p["bi"]
    else:
        iden = x
    out = jax.nn.relu(h3 + iden)
    return jnp.transpose(out, (0, 3, 1, 2))


# ---------------------------------------------------------------------------

if __name__ == "__main__":
    key = jax.random.PRNGKey(0)
    k1, k2, k3, k4 = jax.random.split(key, 4)

    # Case 1: resize path (stride 2, channel expansion) ---------------------
    N, Cin, H, W, Cout, stride = 2, 16, 16, 16, 32, 2
    x = jax.random.normal(k1, (N, Cin, H, W), jnp.float32)   # NCHW like PyTorch
    params = make_params(k2, Cin, Cout)

    fwd = jax.jit(functools.partial(regnet_unit_forward, stride=stride))
    out = jax.block_until_ready(fwd(x, params))
    ref = jax.block_until_ready(regnet_unit_reference(x, params, stride=stride))
    assert out.shape == (N, Cout, H // stride, W // stride), out.shape
    # bf16 weights/activations + f32 accumulation vs f32/HIGHEST reference
    assert jnp.allclose(out, ref, atol=2e-2, rtol=2e-2), "resize-path mismatch"

    # Case 2: identity path (stride 1, same channels) ------------------------
    N2, C2, H2, W2 = 2, 32, 16, 16
    x2 = jax.random.normal(k3, (N2, C2, H2, W2), jnp.float32)
    params2 = make_params(k4, C2, C2)

    fwd2 = jax.jit(functools.partial(regnet_unit_forward, stride=1))
    out2 = jax.block_until_ready(fwd2(x2, params2))
    ref2 = jax.block_until_ready(regnet_unit_reference(x2, params2, stride=1))
    assert out2.shape == (N2, C2, H2, W2), out2.shape
    assert jnp.allclose(out2, ref2, atol=2e-2, rtol=2e-2), "identity-path mismatch"

    print("KERNEL_OK")
</pallas_src>

<mosaic_0001>
module attributes {stable_mosaic.version = 11 : i64} {
  func.func @kernel(%arg0: i32, %arg1: memref<1x16x16x16xf32, #tpu.memory_space<vmem>>, %arg2: memref<16x8xbf16, #tpu.memory_space<vmem>>, %arg3: memref<1x8xf32, #tpu.memory_space<vmem>>, %arg4: memref<9x8x8xbf16, #tpu.memory_space<vmem>>, %arg5: memref<1x8xf32, #tpu.memory_space<vmem>>, %arg6: memref<8x32xbf16, #tpu.memory_space<vmem>>, %arg7: memref<1x32xf32, #tpu.memory_space<vmem>>, %arg8: memref<16x32xbf16, #tpu.memory_space<vmem>>, %arg9: memref<1x8x8x32xf32, #tpu.memory_space<vmem>>, %arg10: memref<18x24x8xf32, #tpu.memory_space<vmem>>) attributes {dimension_semantics = [#tpu.dimension_semantics<parallel>], iteration_bounds = array<i64: 2>, scalar_prefetch = 0 : i64, scratch_operands = 1 : i64, tpu.core_type = #tpu.core_type<tc>, window_params = [{transform_indices = @transform_0, window_bounds = array<i64: 1, 16, 16, 16>}, {pipeline_mode = #tpu.pipeline_mode<synchronous>, transform_indices = @transform_1, window_bounds = array<i64: 16, 8>}, {pipeline_mode = #tpu.pipeline_mode<synchronous>, transform_indices = @transform_2, window_bounds = array<i64: 1, 8>}, {pipeline_mode = #tpu.pipeline_mode<synchronous>, transform_indices = @transform_3, window_bounds = array<i64: 9, 8, 8>}, {pipeline_mode = #tpu.pipeline_mode<synchronous>, transform_indices = @transform_4, window_bounds = array<i64: 1, 8>}, {pipeline_mode = #tpu.pipeline_mode<synchronous>, transform_indices = @transform_5, window_bounds = array<i64: 8, 32>}, {pipeline_mode = #tpu.pipeline_mode<synchronous>, transform_indices = @transform_6, window_bounds = array<i64: 1, 32>}, {pipeline_mode = #tpu.pipeline_mode<synchronous>, transform_indices = @transform_7, window_bounds = array<i64: 16, 32>}, {transform_indices = @transform_8, window_bounds = array<i64: 1, 8, 8, 32>}]} {
    %c0 = arith.constant 0 : index
    %c0_0 = arith.constant 0 : index
    %c0_1 = arith.constant 0 : index
    %c0_2 = arith.constant 0 : index
    %0 = vector.load %arg1[%c0, %c0_0, %c0_1, %c0_2] : memref<1x16x16x16xf32, #tpu.memory_space<vmem>>, vector<1x16x16x16xf32>
    %1 = vector.shape_cast %0 : vector<1x16x16x16xf32> to vector<16x16x16xf32>
    %2 = vector.shape_cast %1 : vector<16x16x16xf32> to vector<256x16xf32>
    %3 = arith.truncf %2 : vector<256x16xf32> to vector<256x16xbf16>
    %c0_3 = arith.constant 0 : index
    %c0_4 = arith.constant 0 : index
    %4 = vector.load %arg2[%c0_3, %c0_4] : memref<16x8xbf16, #tpu.memory_space<vmem>>, vector<16x8xbf16>
    %cst = arith.constant dense<0.000000e+00> : vector<256x8xf32>
    %5 = tpu.matmul %3, %4, %cst {dimension_numbers = #tpu.dot_dimension_numbers<[1], [0], [0], [1], [0, 0, 1, 1], [], []>} : vector<256x16xbf16>, vector<16x8xbf16>, vector<256x8xf32> -> vector<256x8xf32>
    %c0_5 = arith.constant 0 : index
    %c0_6 = arith.constant 0 : index
    %6 = vector.load %arg3[%c0_5, %c0_6] : memref<1x8xf32, #tpu.memory_space<vmem>>, vector<1x8xf32>
    %7 = vector.broadcast %6 : vector<1x8xf32> to vector<256x8xf32>
    %8 = arith.addf %5, %7 : vector<256x8xf32>
    %cst_7 = arith.constant 0.000000e+00 : f32
    %9 = vector.broadcast %cst_7 : f32 to vector<256x8xf32>
    %10 = arith.maximumf %8, %9 : vector<256x8xf32>
    %cst_8 = arith.constant 0.000000e+00 : f32
    %11 = vector.broadcast %cst_8 : f32 to vector<1x24x8xf32>
    %c0_9 = arith.constant 0 : index
    %c0_10 = arith.constant 0 : index
    %c0_11 = arith.constant 0 : index
    %12 = vector.load %arg10[%c0_9, %c0_10, %c0_11] : memref<18x24x8xf32, #tpu.memory_space<vmem>>, vector<1x24x8xf32>
    tpu.vector_store %arg10[%c0_9, %c0_10, %c0_11], %11 {strides = array<i32>} : memref<18x24x8xf32, #tpu.memory_space<vmem>>, vector<1x24x8xf32>,
    %cst_12 = arith.constant 0.000000e+00 : f32
    %13 = vector.broadcast %cst_12 : f32 to vector<1x24x8xf32>
    %c17 = arith.constant 17 : index
    %c0_13 = arith.constant 0 : index
    %c0_14 = arith.constant 0 : index
    %14 = vector.load %arg10[%c17, %c0_13, %c0_14] : memref<18x24x8xf32, #tpu.memory_space<vmem>>, vector<1x24x8xf32>
    tpu.vector_store %arg10[%c17, %c0_13, %c0_14], %13 {strides = array<i32>} : memref<18x24x8xf32, #tpu.memory_space<vmem>>, vector<1x24x8xf32>,
    %cst_15 = arith.constant 0.000000e+00 : f32
    %15 = vector.broadcast %cst_15 : f32 to vector<18x1x8xf32>
    %c0_16 = arith.constant 0 : index
    %c0_17 = arith.constant 0 : index
    %c0_18 = arith.constant 0 : index
    %16 = vector.load %arg10[%c0_16, %c0_17, %c0_18] : memref<18x24x8xf32, #tpu.memory_space<vmem>>, vector<18x1x8xf32>
    tpu.vector_store %arg10[%c0_16, %c0_17, %c0_18], %15 {strides = array<i32>} : memref<18x24x8xf32, #tpu.memory_space<vmem>>, vector<18x1x8xf32>,
    %cst_19 = arith.constant 0.000000e+00 : f32
    %17 = vector.broadcast %cst_19 : f32 to vector<18x7x8xf32>
    %c0_20 = arith.constant 0 : index
    %c17_21 = arith.constant 17 : index
    %c0_22 = arith.constant 0 : index
    %18 = vector.load %arg10[%c0_20, %c17_21, %c0_22] : memref<18x24x8xf32, #tpu.memory_space<vmem>>, vector<18x7x8xf32>
    tpu.vector_store %arg10[%c0_20, %c17_21, %c0_22], %17 {strides = array<i32>} : memref<18x24x8xf32, #tpu.memory_space<vmem>>, vector<18x7x8xf32>,
    %19 = vector.shape_cast %10 : vector<256x8xf32> to vector<16x16x8xf32>
    %c1 = arith.constant 1 : index
    %c1_23 = arith.constant 1 : index
    %c0_24 = arith.constant 0 : index
    %20 = vector.load %arg10[%c1, %c1_23, %c0_24] : memref<18x24x8xf32, #tpu.memory_space<vmem>>, vector<16x16x8xf32>
    tpu.vector_store %arg10[%c1, %c1_23, %c0_24], %19 {strides = array<i32>} : memref<18x24x8xf32, #tpu.memory_space<vmem>>, vector<16x16x8xf32>,
    %cst_25 = arith.constant 0.000000e+00 : f32
    %21 = vector.broadcast %cst_25 : f32 to vector<64x8xf32>
    %c0_26 = arith.constant 0 : index
    %c0_27 = arith.constant 0 : index
    %c0_28 = arith.constant 0 : index
    %22 = tpu.strided_load %arg10[%c0_26, %c0_27, %c0_28] {strides = array<i32: 2, 2, 1>} : memref<18x24x8xf32, #tpu.memory_space<vmem>>, vector<8x8x8xf32>
    %23 = vector.shape_cast %22 : vector<8x8x8xf32> to vector<64x8xf32>
    %24 = arith.truncf %23 : vector<64x8xf32> to vector<64x8xbf16>
    %c0_29 = arith.constant 0 : index
    %c0_30 = arith.constant 0 : index
    %c0_31 = arith.constant 0 : index
    %25 = vector.load %arg4[%c0_29, %c0_30, %c0_31] : memref<9x8x8xbf16, #tpu.memory_space<vmem>>, vector<1x8x8xbf16>
    %26 = vector.shape_cast %25 : vector<1x8x8xbf16> to vector<8x8xbf16>
    %cst_32 = arith.constant dense<0.000000e+00> : vector<64x8xf32>
    %27 = tpu.matmul %24, %26, %cst_32 {dimension_numbers = #tpu.dot_dimension_numbers<[1], [0], [0], [1], [0, 0, 1, 1], [], []>} : vector<64x8xbf16>, vector<8x8xbf16>, vector<64x8xf32> -> vector<64x8xf32>
    %28 = arith.addf %21, %27 : vector<64x8xf32>
    %c0_33 = arith.constant 0 : index
    %c1_34 = arith.constant 1 : index
    %c0_35 = arith.constant 0 : index
    %29 = tpu.strided_load %arg10[%c0_33, %c1_34, %c0_35] {strides = array<i32: 2, 2, 1>} : memref<18x24x8xf32, #tpu.memory_space<vmem>>, vector<8x8x8xf32>
    %30 = vector.shape_cast %29 : vector<8x8x8xf32> to vector<64x8xf32>
    %31 = arith.truncf %30 : vector<64x8xf32> to vector<64x8xbf16>
    %c1_36 = arith.constant 1 : index
    %c0_37 = arith.constant 0 : index
    %c0_38 = arith.constant 0 : index
    %32 = vector.load %arg4[%c1_36, %c0_37, %c0_38] : memref<9x8x8xbf16, #tpu.memory_space<vmem>>, vector<1x8x8xbf16>
    %33 = vector.shape_cast %32 : vector<1x8x8xbf16> to vector<8x8xbf16>
    %cst_39 = arith.constant dense<0.000000e+00> : vector<64x8xf32>
    %34 = tpu.matmul %31, %33, %cst_39 {dimension_numbers = #tpu.dot_dimension_numbers<[1], [0], [0], [1], [0, 0, 1, 1], [], []>} : vector<64x8xbf16>, vector<8x8xbf16>, vector<64x8xf32> -> vector<64x8xf32>
    %35 = arith.addf %28, %34 : vector<64x8xf32>
    %c0_40 = arith.constant 0 : index
    %c2 = arith.constant 2 : index
    %c0_41 = arith.constant 0 : index
    %36 = tpu.strided_load %arg10[%c0_40, %c2, %c0_41] {strides = array<i32: 2, 2, 1>} : memref<18x24x8xf32, #tpu.memory_space<vmem>>, vector<8x8x8xf32>
    %37 = vector.shape_cast %36 : vector<8x8x8xf32> to vector<64x8xf32>
    %38 = arith.truncf %37 : vector<64x8xf32> to vector<64x8xbf16>
    %c2_42 = arith.constant 2 : index
    %c0_43 = arith.constant 0 : index
    %c0_44 = arith.constant 0 : index
    %39 = vector.load %arg4[%c2_42, %c0_43, %c0_44] : memref<9x8x8xbf16, #tpu.memory_space<vmem>>, vector<1x8x8xbf16>
    %40 = vector.shape_cast %39 : vector<1x8x8xbf16> to vector<8x8xbf16>
    %cst_45 = arith.constant dense<0.000000e+00> : vector<64x8xf32>
    %41 = tpu.matmul %38, %40, %cst_45 {dimension_numbers = #tpu.dot_dimension_numbers<[1], [0], [0], [1], [0, 0, 1, 1], [], []>} : vector<64x8xbf16>, vector<8x8xbf16>, vector<64x8xf32> -> vector<64x8xf32>
    %42 = arith.addf %35, %41 : vector<64x8xf32>
    %c1_46 = arith.constant 1 : index
    %c0_47 = arith.constant 0 : index
    %c0_48 = arith.constant 0 : index
    %43 = tpu.strided_load %arg10[%c1_46, %c0_47, %c0_48] {strides = array<i32: 2, 2, 1>} : memref<18x24x8xf32, #tpu.memory_space<vmem>>, vector<8x8x8xf32>
    %44 = vector.shape_cast %43 : vector<8x8x8xf32> to vector<64x8xf32>
    %45 = arith.truncf %44 : vector<64x8xf32> to vector<64x8xbf16>
    %c3 = arith.constant 3 : index
    %c0_49 = arith.constant 0 : index
    %c0_50 = arith.constant 0 : index
    %46 = vector.load %arg4[%c3, %c0_49, %c0_50] : memref<9x8x8xbf16, #tpu.memory_space<vmem>>, vector<1x8x8xbf16>
    %47 = vector.shape_cast %46 : vector<1x8x8xbf16> to vector<8x8xbf16>
    %cst_51 = arith.constant dense<0.000000e+00> : vector<64x8xf32>
    %48 = tpu.matmul %45, %47, %cst_51 {dimension_numbers = #tpu.dot_dimension_numbers<[1], [0], [0], [1], [0, 0, 1, 1], [], []>} : vector<64x8xbf16>, vector<8x8xbf16>, vector<64x8xf32> -> vector<64x8xf32>
    %49 = arith.addf %42, %48 : vector<64x8xf32>
    %c1_52 = arith.constant 1 : index
    %c1_53 = arith.constant 1 : index
    %c0_54 = arith.constant 0 : index
    %50 = tpu.strided_load %arg10[%c1_52, %c1_53, %c0_54] {strides = array<i32: 2, 2, 1>} : memref<18x24x8xf32, #tpu.memory_space<vmem>>, vector<8x8x8xf32>
    %51 = vector.shape_cast %50 : vector<8x8x8xf32> to vector<64x8xf32>
    %52 = arith.truncf %51 : vector<64x8xf32> to vector<64x8xbf16>
    %c4 = arith.constant 4 : index
    %c0_55 = arith.constant 0 : index
    %c0_56 = arith.constant 0 : index
    %53 = vector.load %arg4[%c4, %c0_55, %c0_56] : memref<9x8x8xbf16, #tpu.memory_space<vmem>>, vector<1x8x8xbf16>
    %54 = vector.shape_cast %53 : vector<1x8x8xbf16> to vector<8x8xbf16>
    %cst_57 = arith.constant dense<0.000000e+00> : vector<64x8xf32>
    %55 = tpu.matmul %52, %54, %cst_57 {dimension_numbers = #tpu.dot_dimension_numbers<[1], [0], [0], [1], [0, 0, 1, 1], [], []>} : vector<64x8xbf16>, vector<8x8xbf16>, vector<64x8xf32> -> vector<64x8xf32>
    %56 = arith.addf %49, %55 : vector<64x8xf32>
    %c1_58 = arith.constant 1 : index
    %c2_59 = arith.constant 2 : index
    %c0_60 = arith.constant 0 : index
    %57 = tpu.strided_load %arg10[%c1_58, %c2_59, %c0_60] {strides = array<i32: 2, 2, 1>} : memref<18x24x8xf32, #tpu.memory_space<vmem>>, vector<8x8x8xf32>
    %58 = vector.shape_cast %57 : vector<8x8x8xf32> to vector<64x8xf32>
    %59 = arith.truncf %58 : vector<64x8xf32> to vector<64x8xbf16>
    %c5 = arith.constant 5 : index
    %c0_61 = arith.constant 0 : index
    %c0_62 = arith.constant 0 : index
    %60 = vector.load %arg4[%c5, %c0_61, %c0_62] : memref<9x8x8xbf16, #tpu.memory_space<vmem>>, vector<1x8x8xbf16>
    %61 = vector.shape_cast %60 : vector<1x8x8xbf16> to vector<8x8xbf16>
    %cst_63 = arith.constant dense<0.000000e+00> : vector<64x8xf32>
    %62 = tpu.matmul %59, %61, %cst_63 {dimension_numbers = #tpu.dot_dimension_numbers<[1], [0], [0], [1], [0, 0, 1, 1], [], []>} : vector<64x8xbf16>, vector<8x8xbf16>, vector<64x8xf32> -> vector<64x8xf32>
    %63 = arith.addf %56, %62 : vector<64x8xf32>
    %c2_64 = arith.constant 2 : index
    %c0_65 = arith.constant 0 : index
    %c0_66 = arith.constant 0 : index
    %64 = tpu.strided_load %arg10[%c2_64, %c0_65, %c0_66] {strides = array<i32: 2, 2, 1>} : memref<18x24x8xf32, #tpu.memory_space<vmem>>, vector<8x8x8xf32>
    %65 = vector.shape_cast %64 : vector<8x8x8xf32> to vector<64x8xf32>
    %66 = arith.truncf %65 : vector<64x8xf32> to vector<64x8xbf16>
    %c6 = arith.constant 6 : index
    %c0_67 = arith.constant 0 : index
    %c0_68 = arith.constant 0 : index
    %67 = vector.load %arg4[%c6, %c0_67, %c0_68] : memref<9x8x8xbf16, #tpu.memory_space<vmem>>, vector<1x8x8xbf16>
    %68 = vector.shape_cast %67 : vector<1x8x8xbf16> to vector<8x8xbf16>
    %cst_69 = arith.constant dense<0.000000e+00> : vector<64x8xf32>
    %69 = tpu.matmul %66, %68, %cst_69 {dimension_numbers = #tpu.dot_dimension_numbers<[1], [0], [0], [1], [0, 0, 1, 1], [], []>} : vector<64x8xbf16>, vector<8x8xbf16>, vector<64x8xf32> -> vector<64x8xf32>
    %70 = arith.addf %63, %69 : vector<64x8xf32>
    %c2_70 = arith.constant 2 : index
    %c1_71 = arith.constant 1 : index
    %c0_72 = arith.constant 0 : index
    %71 = tpu.strided_load %arg10[%c2_70, %c1_71, %c0_72] {strides = array<i32: 2, 2, 1>} : memref<18x24x8xf32, #tpu.memory_space<vmem>>, vector<8x8x8xf32>
    %72 = vector.shape_cast %71 : vector<8x8x8xf32> to vector<64x8xf32>
    %73 = arith.truncf %72 : vector<64x8xf32> to vector<64x8xbf16>
    %c7 = arith.constant 7 : index
    %c0_73 = arith.constant 0 : index
    %c0_74 = arith.constant 0 : index
    %74 = vector.load %arg4[%c7, %c0_73, %c0_74] : memref<9x8x8xbf16, #tpu.memory_space<vmem>>, vector<1x8x8xbf16>
    %75 = vector.shape_cast %74 : vector<1x8x8xbf16> to vector<8x8xbf16>
    %cst_75 = arith.constant dense<0.000000e+00> : vector<64x8xf32>
    %76 = tpu.matmul %73, %75, %cst_75 {dimension_numbers = #tpu.dot_dimension_numbers<[1], [0], [0], [1], [0, 0, 1, 1], [], []>} : vector<64x8xbf16>, vector<8x8xbf16>, vector<64x8xf32> -> vector<64x8xf32>
    %77 = arith.addf %70, %76 : vector<64x8xf32>
    %c2_76 = arith.constant 2 : index
    %c2_77 = arith.constant 2 : index
    %c0_78 = arith.constant 0 : index
    %78 = tpu.strided_load %arg10[%c2_76, %c2_77, %c0_78] {strides = array<i32: 2, 2, 1>} : memref<18x24x8xf32, #tpu.memory_space<vmem>>, vector<8x8x8xf32>
    %79 = vector.shape_cast %78 : vector<8x8x8xf32> to vector<64x8xf32>
    %80 = arith.truncf %79 : vector<64x8xf32> to vector<64x8xbf16>
    %c8 = arith.constant 8 : index
    %c0_79 = arith.constant 0 : index
    %c0_80 = arith.constant 0 : index
    %81 = vector.load %arg4[%c8, %c0_79, %c0_80] : memref<9x8x8xbf16, #tpu.memory_space<vmem>>, vector<1x8x8xbf16>
    %82 = vector.shape_cast %81 : vector<1x8x8xbf16> to vector<8x8xbf16>
    %cst_81 = arith.constant dense<0.000000e+00> : vector<64x8xf32>
    %83 = tpu.matmul %80, %82, %cst_81 {dimension_numbers = #tpu.dot_dimension_numbers<[1], [0], [0], [1], [0, 0, 1, 1], [], []>} : vector<64x8xbf16>, vector<8x8xbf16>, vector<64x8xf32> -> vector<64x8xf32>
    %84 = arith.addf %77, %83 : vector<64x8xf32>
    %c0_82 = arith.constant 0 : index
    %c0_83 = arith.constant 0 : index
    %85 = vector.load %arg5[%c0_82, %c0_83] : memref<1x8xf32, #tpu.memory_space<vmem>>, vector<1x8xf32>
    %86 = vector.broadcast %85 : vector<1x8xf32> to vector<64x8xf32>
    %87 = arith.addf %84, %86 : vector<64x8xf32>
    %cst_84 = arith.constant 0.000000e+00 : f32
    %88 = vector.broadcast %cst_84 : f32 to vector<64x8xf32>
    %89 = arith.maximumf %87, %88 : vector<64x8xf32>
    %90 = arith.truncf %89 : vector<64x8xf32> to vector<64x8xbf16>
    %c0_85 = arith.constant 0 : index
    %c0_86 = arith.constant 0 : index
    %91 = vector.load %arg6[%c0_85, %c0_86] : memref<8x32xbf16, #tpu.memory_space<vmem>>, vector<8x32xbf16>
    %cst_87 = arith.constant dense<0.000000e+00> : vector<64x32xf32>
    %92 = tpu.matmul %90, %91, %cst_87 {dimension_numbers = #tpu.dot_dimension_numbers<[1], [0], [0], [1], [0, 0, 1, 1], [], []>} : vector<64x8xbf16>, vector<8x32xbf16>, vector<64x32xf32> -> vector<64x32xf32>
    %c0_88 = arith.constant 0 : index
    %c0_89 = arith.constant 0 : index
    %c0_90 = arith.constant 0 : index
    %c0_91 = arith.constant 0 : index
    %93 = tpu.strided_load %arg1[%c0_88, %c0_89, %c0_90, %c0_91] {strides = array<i32: 1, 2, 2, 1>} : memref<1x16x16x16xf32, #tpu.memory_space<vmem>>, vector<1x8x8x16xf32>
    %94 = vector.shape_cast %93 : vector<1x8x8x16xf32> to vector<8x8x16xf32>
    %95 = vector.shape_cast %94 : vector<8x8x16xf32> to vector<64x16xf32>
    %96 = arith.truncf %95 : vector<64x16xf32> to vector<64x16xbf16>
    %c0_92 = arith.constant 0 : index
    %c0_93 = arith.constant 0 : index
    %97 = vector.load %arg8[%c0_92, %c0_93] : memref<16x32xbf16, #tpu.memory_space<vmem>>, vector<16x32xbf16>
    %cst_94 = arith.constant dense<0.000000e+00> : vector<64x32xf32>
    %98 = tpu.matmul %96, %97, %cst_94 {dimension_numbers = #tpu.dot_dimension_numbers<[1], [0], [0], [1], [0, 0, 1, 1], [], []>} : vector<64x16xbf16>, vector<16x32xbf16>, vector<64x32xf32> -> vector<64x32xf32>
    %99 = arith.addf %92, %98 : vector<64x32xf32>
    %c0_95 = arith.constant 0 : index
    %c0_96 = arith.constant 0 : index
    %100 = vector.load %arg7[%c0_95, %c0_96] : memref<1x32xf32, #tpu.memory_space<vmem>>, vector<1x32xf32>
    %101 = vector.broadcast %100 : vector<1x32xf32> to vector<64x32xf32>
    %102 = arith.addf %99, %101 : vector<64x32xf32>
    %cst_97 = arith.constant 0.000000e+00 : f32
    %103 = vector.broadcast %cst_97 : f32 to vector<64x32xf32>
    %104 = arith.maximumf %102, %103 : vector<64x32xf32>
    %105 = vector.shape_cast %104 : vector<64x32xf32> to vector<8x8x32xf32>
    %c0_98 = arith.constant 0 : index
    %c0_99 = arith.constant 0 : index
    %c0_100 = arith.constant 0 : index
    %c0_101 = arith.constant 0 : index
    %106 = vector.load %arg9[%c0_98, %c0_99, %c0_100, %c0_101] : memref<1x8x8x32xf32, #tpu.memory_space<vmem>>, vector<1x8x8x32xf32>
    %107 = vector.shape_cast %106 : vector<1x8x8x32xf32> to vector<8x8x32xf32>
    %108 = vector.shape_cast %105 : vector<8x8x32xf32> to vector<1x8x8x32xf32>
    tpu.vector_store %arg9[%c0_98, %c0_99, %c0_100, %c0_101], %108 {strides = array<i32>} : memref<1x8x8x32xf32, #tpu.memory_space<vmem>>, vector<1x8x8x32xf32>,
    return
  }
  func.func @transform_0(%arg0: i32) -> (i32, i32, i32, i32) {
    %c0_i32 = arith.constant 0 : i32
    %c0_i32_0 = arith.constant 0 : i32
    %c0_i32_1 = arith.constant 0 : i32
    %c0_i32_2 = arith.constant 0 : i32
    return %arg0, %c0_i32, %c0_i32_0, %c0_i32_1 : i32, i32, i32, i32
  }
  func.func @transform_1(%arg0: i32) -> (i32, i32) {
    %c0_i32 = arith.constant 0 : i32
    %c0_i32_0 = arith.constant 0 : i32
    %c0_i32_1 = arith.constant 0 : i32
    return %c0_i32, %c0_i32_0 : i32, i32
  }
  func.func @transform_2(%arg0: i32) -> (i32, i32) {
    %c0_i32 = arith.constant 0 : i32
    %c0_i32_0 = arith.constant 0 : i32
    %c0_i32_1 = arith.constant 0 : i32
    return %c0_i32, %c0_i32_0 : i32, i32
  }
  func.func @transform_3(%arg0: i32) -> (i32, i32, i32) {
    %c0_i32 = arith.constant 0 : i32
    %c0_i32_0 = arith.constant 0 : i32
    %c0_i32_1 = arith.constant 0 : i32
    %c0_i32_2 = arith.constant 0 : i32
    return %c0_i32, %c0_i32_0, %c0_i32_1 : i32, i32, i32
  }
  func.func @transform_4(%arg0: i32) -> (i32, i32) {
    %c0_i32 = arith.constant 0 : i32
    %c0_i32_0 = arith.constant 0 : i32
    %c0_i32_1 = arith.constant 0 : i32
    return %c0_i32, %c0_i32_0 : i32, i32
  }
  func.func @transform_5(%arg0: i32) -> (i32, i32) {
    %c0_i32 = arith.constant 0 : i32
    %c0_i32_0 = arith.constant 0 : i32
    %c0_i32_1 = arith.constant 0 : i32
    return %c0_i32, %c0_i32_0 : i32, i32
  }
  func.func @transform_6(%arg0: i32) -> (i32, i32) {
    %c0_i32 = arith.constant 0 : i32
    %c0_i32_0 = arith.constant 0 : i32
    %c0_i32_1 = arith.constant 0 : i32
    return %c0_i32, %c0_i32_0 : i32, i32
  }
  func.func @transform_7(%arg0: i32) -> (i32, i32) {
    %c0_i32 = arith.constant 0 : i32
    %c0_i32_0 = arith.constant 0 : i32
    %c0_i32_1 = arith.constant 0 : i32
    return %c0_i32, %c0_i32_0 : i32, i32
  }
  func.func @transform_8(%arg0: i32) -> (i32, i32, i32, i32) {
    %c0_i32 = arith.constant 0 : i32
    %c0_i32_0 = arith.constant 0 : i32
    %c0_i32_1 = arith.constant 0 : i32
    %c0_i32_2 = arith.constant 0 : i32
    return %arg0, %c0_i32, %c0_i32_0, %c0_i32_1 : i32, i32, i32, i32
  }
}

</mosaic_0001>

<llo_original>
// kernel: regnet_unit_forward.1
$region0: #{regnet_unit_forward.1}
  #allocation0 [shape = 'u32[]', space=smem, size = 0x4, offset = 0x4, fixed_abs, tag = 'smem constant byte address 0x4 - core index']
  #allocation1 [shape = 'u32[144,128]{1,0:T(1,128)}', space=vmem, size = 0x12000, scoped, tag = 'internal scratch']
  #allocation2 [shape = 'f32[18,24,8]{2,1,0:T(8,128)}', space=vmem, size = 0x36000, scoped, tag = 'scratch operand']
  %s0 = inlined_call_operand.vmem [shape: f32[2,16,16,16], index: 0, kind: input, shape index: {}]
  %s1 = inlined_call_operand.vmem [shape: bf16[16,8], index: 1, kind: input, shape index: {}]
  %s2 = inlined_call_operand.vmem [shape: f32[1,8], index: 2, kind: input, shape index: {}]
  %s3 = inlined_call_operand.vmem [shape: bf16[9,8,8], index: 3, kind: input, shape index: {}]
  %s4 = inlined_call_operand.vmem [shape: f32[1,8], index: 4, kind: input, shape index: {}]
  %s5 = inlined_call_operand.vmem [shape: bf16[8,32], index: 5, kind: input, shape index: {}]
  %s6 = inlined_call_operand.vmem [shape: f32[1,32], index: 6, kind: input, shape index: {}]
  %s7 = inlined_call_operand.vmem [shape: bf16[16,32], index: 7, kind: input, shape index: {}]
  %s8 = inlined_call_operand.hbm [shape: f32[2,8,8,32], index: 8, kind: output, shape index: {}]
  %s9 = sld [smem:[#allocation0]]
  $region65: #{regnet_unit_forward.1} parent=0
    _
  %s11 = ssub.s32 1, %s9
  %s12 = scalar_select 0, %s11, %s9
  $region1: #{regnet_unit_forward.1} parent=0
    #allocation3 [shape = 'u8[65536]{0}', space=vmem, size = 0x10000, scoped, tag = 'output window, operand 0']
    #allocation4 [shape = 's32[2]{0}', space=sflag, size = 0x8, scoped, tag = 'scoped memory for regnet_unit_forward.1']
    %13 = vsyncpa [#allocation4], 0
    %s14 = scalar_lea.sflag [#allocation4], 1
    %15 = vsyncpa %s14, 0
    loop: start=0, step=1, limit=4
    $region2: #{regnet_unit_forward.1} parent=1 // loop_pre_header
      _
    $region3: #{regnet_unit_forward.1} parent=1 // loop_header
      %s17 = sphi 0, %s21
      %p18 = scmp.ge.s32.totalorder %s17, 4
      %s27 = sphi 0, %s29
      %s30 = sphi 0, %s27
      %s31 = sphi 0, %s30
      %s47 = sphi 0, %s31
      %s51 = sphi 0, %s51
      %s53 = sphi 0, %s51
      %s54 = sphi 0, %s53
      %s68 = sphi 0, %s54
      %s72 = sphi 0, %s72
      %s74 = sphi 0, %s72
      %s75 = sphi 0, %s74
      %s89 = sphi 0, %s75
      %s93 = sphi 0, %s93
      %s95 = sphi 0, %s93
      %s96 = sphi 0, %s95
      %s110 = sphi 0, %s96
      %s114 = sphi 0, %s114
      %s116 = sphi 0, %s114
      %s117 = sphi 0, %s116
      %s131 = sphi 0, %s117
      %s135 = sphi 0, %s135
      %s137 = sphi 0, %s135
      %s138 = sphi 0, %s137
      %s152 = sphi 0, %s138
      %s156 = sphi 0, %s156
      %s158 = sphi 0, %s156
      %s159 = sphi 0, %s158
      %s173 = sphi 0, %s159
      %s177 = sphi 0, %s177
      %s179 = sphi 0, %s177
      %s180 = sphi 0, %s179
      %s194 = sphi 0, %s180
      %s200 = sphi 0, %s202
      %s203 = sphi 0, %s200
      %s204 = sphi 0, %s203
      %s220 = sphi 0, %s204
    $region4: #{regnet_unit_forward.1} parent=1 // loop_header_branch
      %20 = sbr.rel (%p18) target = $region8
    $region5: #{regnet_unit_forward.1} parent=1 // loop_body
      %s22 = ssub.s32 %s17, 1
      %s23 = ssub.s32 %s17, 2
      %s24 = sadd.s32 %s17, 1
      %s25 = ssub.s32 %s17, %s24
      %p26 = scmp.eq.s32.totalorder %s25, 0
      %s28 = sadd.s32 %s27, 1
      %s29 = scalar_select %p26, %s27, %s28
      %p32 = pneg %p26
      %p33 = scmp.eq.s32.totalorder %s17, 1
      %p34 = por %p32, %p33
      %p35 = scmp.ne.s32.totalorder %s27, %s30
      %p36 = scmp.eq.s32.totalorder %s17, 0
      %p37 = por %p35, %p36
      %p38 = scmp.ne.s32.totalorder %s27, %s30
      %p39 = scmp.eq.s32.totalorder %s22, 1
      %p40 = por %p38, %p39
      %p41 = scmp.ne.s32.totalorder %s30, %s31
      %p42 = scmp.eq.s32.totalorder %s22, 0
      %p43 = por %p41, %p42
      %p44 = scmp.ne.s32.totalorder %s30, %s31
      %p45 = scmp.eq.s32.totalorder %s23, 1
      %p46 = por %p44, %p45
      %p48 = scmp.ne.s32.totalorder %s31, %s47
      %p49 = scmp.eq.s32.totalorder %s23, 0
      %p50 = por %p48, %p49
      %s52 = sadd.s32 %s51, 1
      %p55 = scmp.eq.s32.totalorder %s17, 1
      %p56 = scmp.ne.s32.totalorder %s51, %s53
      %p57 = scmp.eq.s32.totalorder %s17, 0
      %p58 = por %p56, %p57
      %p59 = scmp.ne.s32.totalorder %s51, %s53
      %p60 = scmp.eq.s32.totalorder %s22, 1
      %p61 = por %p59, %p60
      %p62 = scmp.ne.s32.totalorder %s53, %s54
      %p63 = scmp.eq.s32.totalorder %s22, 0
      %p64 = por %p62, %p63
      %p65 = scmp.ne.s32.totalorder %s53, %s54
      %p66 = scmp.eq.s32.totalorder %s23, 1
      %p67 = por %p65, %p66
      %p69 = scmp.ne.s32.totalorder %s54, %s68
      %p70 = scmp.eq.s32.totalorder %s23, 0
      %p71 = por %p69, %p70
      %s73 = sadd.s32 %s72, 1
      %p76 = scmp.eq.s32.totalorder %s17, 1
      %p77 = scmp.ne.s32.totalorder %s72, %s74
      %p78 = scmp.eq.s32.totalorder %s17, 0
      %p79 = por %p77, %p78
      %p80 = scmp.ne.s32.totalorder %s72, %s74
      %p81 = scmp.eq.s32.totalorder %s22, 1
      %p82 = por %p80, %p81
      %p83 = scmp.ne.s32.totalorder %s74, %s75
      %p84 = scmp.eq.s32.totalorder %s22, 0
      %p85 = por %p83, %p84
      %p86 = scmp.ne.s32.totalorder %s74, %s75
      %p87 = scmp.eq.s32.totalorder %s23, 1
      %p88 = por %p86, %p87
      %p90 = scmp.ne.s32.totalorder %s75, %s89
      %p91 = scmp.eq.s32.totalorder %s23, 0
      %p92 = por %p90, %p91
      %s94 = sadd.s32 %s93, 1
      %p97 = scmp.eq.s32.totalorder %s17, 1
      %p98 = scmp.ne.s32.totalorder %s93, %s95
      %p99 = scmp.eq.s32.totalorder %s17, 0
      %p100 = por %p98, %p99
      %p101 = scmp.ne.s32.totalorder %s93, %s95
      %p102 = scmp.eq.s32.totalorder %s22, 1
      %p103 = por %p101, %p102
      %p104 = scmp.ne.s32.totalorder %s95, %s96
      %p105 = scmp.eq.s32.totalorder %s22, 0
      %p106 = por %p104, %p105
      %p107 = scmp.ne.s32.totalorder %s95, %s96
      %p108 = scmp.eq.s32.totalorder %s23, 1
      %p109 = por %p107, %p108
      %p111 = scmp.ne.s32.totalorder %s96, %s110
      %p112 = scmp.eq.s32.totalorder %s23, 0
      %p113 = por %p111, %p112
      %s115 = sadd.s32 %s114, 1
      %p118 = scmp.eq.s32.totalorder %s17, 1
      %p119 = scmp.ne.s32.totalorder %s114, %s116
      %p120 = scmp.eq.s32.totalorder %s17, 0
      %p121 = por %p119, %p120
      %p122 = scmp.ne.s32.totalorder %s114, %s116
      %p123 = scmp.eq.s32.totalorder %s22, 1
      %p124 = por %p122, %p123
      %p125 = scmp.ne.s32.totalorder %s116, %s117
      %p126 = scmp.eq.s32.totalorder %s22, 0
      %p127 = por %p125, %p126
      %p128 = scmp.ne.s32.totalorder %s116, %s117
      %p129 = scmp.eq.s32.totalorder %s23, 1
      %p130 = por %p128, %p129
      %p132 = scmp.ne.s32.totalorder %s117, %s131
      %p133 = scmp.eq.s32.totalorder %s23, 0
      %p134 = por %p132, %p133
      %s136 = sadd.s32 %s135, 1
      %p139 = scmp.eq.s32.totalorder %s17, 1
      %p140 = scmp.ne.s32.totalorder %s135, %s137
      %p141 = scmp.eq.s32.totalorder %s17, 0
      %p142 = por %p140, %p141
      %p143 = scmp.ne.s32.totalorder %s135, %s137
      %p144 = scmp.eq.s32.totalorder %s22, 1
      %p145 = por %p143, %p144
      %p146 = scmp.ne.s32.totalorder %s137, %s138
      %p147 = scmp.eq.s32.totalorder %s22, 0
      %p148 = por %p146, %p147
      %p149 = scmp.ne.s32.totalorder %s137, %s138
      %p150 = scmp.eq.s32.totalorder %s23, 1
      %p151 = por %p149, %p150
      %p153 = scmp.ne.s32.totalorder %s138, %s152
      %p154 = scmp.eq.s32.totalorder %s23, 0
      %p155 = por %p153, %p154
      %s157 = sadd.s32 %s156, 1
      %p160 = scmp.eq.s32.totalorder %s17, 1
      %p161 = scmp.ne.s32.totalorder %s156, %s158
      %p162 = scmp.eq.s32.totalorder %s17, 0
      %p163 = por %p161, %p162
      %p164 = scmp.ne.s32.totalorder %s156, %s158
      %p165 = scmp.eq.s32.totalorder %s22, 1
      %p166 = por %p164, %p165
      %p167 = scmp.ne.s32.totalorder %s158, %s159
      %p168 = scmp.eq.s32.totalorder %s22, 0
      %p169 = por %p167, %p168
      %p170 = scmp.ne.s32.totalorder %s158, %s159
      %p171 = scmp.eq.s32.totalorder %s23, 1
      %p172 = por %p170, %p171
      %p174 = scmp.ne.s32.totalorder %s159, %s173
      %p175 = scmp.eq.s32.totalorder %s23, 0
      %p176 = por %p174, %p175
      %s178 = sadd.s32 %s177, 1
      %p181 = scmp.eq.s32.totalorder %s17, 1
      %p182 = scmp.ne.s32.totalorder %s177, %s179
      %p183 = scmp.eq.s32.totalorder %s17, 0
      %p184 = por %p182, %p183
      %p185 = scmp.ne.s32.totalorder %s177, %s179
      %p186 = scmp.eq.s32.totalorder %s22, 1
      %p187 = por %p185, %p186
      %p188 = scmp.ne.s32.totalorder %s179, %s180
      %p189 = scmp.eq.s32.totalorder %s22, 0
      %p190 = por %p188, %p189
      %p191 = scmp.ne.s32.totalorder %s179, %s180
      %p192 = scmp.eq.s32.totalorder %s23, 1
      %p193 = por %p191, %p192
      %p195 = scmp.ne.s32.totalorder %s180, %s194
      %p196 = scmp.eq.s32.totalorder %s23, 0
      %p197 = por %p195, %p196
      %s198 = ssub.s32 %s17, %s24
      %p199 = scmp.eq.s32.totalorder %s198, 0
      %s201 = sadd.s32 %s200, 1
      %s202 = scalar_select %p199, %s200, %s201
      %p205 = pneg %p199
      %p206 = scmp.eq.s32.totalorder %s17, 1
      %p207 = por %p205, %p206
      %p208 = scmp.ne.s32.totalorder %s200, %s203
      %p209 = scmp.eq.s32.totalorder %s17, 0
      %p210 = por %p208, %p209
      %p211 = scmp.ne.s32.totalorder %s200, %s203
      %p212 = scmp.eq.s32.totalorder %s22, 1
      %p213 = por %p211, %p212
      %p214 = scmp.ne.s32.totalorder %s203, %s204
      %p215 = scmp.eq.s32.totalorder %s22, 0
      %p216 = por %p214, %p215
      %p217 = scmp.ne.s32.totalorder %s203, %s204
      %p218 = scmp.eq.s32.totalorder %s23, 1
      %p219 = por %p217, %p218
      %p221 = scmp.ne.s32.totalorder %s204, %s220
      %p222 = scmp.eq.s32.totalorder %s23, 0
      %p223 = por %p221, %p222
      %p224 = scmp.le.s32.totalorder 1, %s17
      %p225 = scmp.lt.s32.totalorder %s17, 3
      %p226 = pnand %p224, %p225
      %p227 = pneg %p226
      // Predicated region
      $region9: #{regnet_unit_forward.1} parent=5 // pred_check
        _
      $region10: #{regnet_unit_forward.1} parent=5 // pred_check_branch
        %229 = sbr.rel (%p226) target = $region12
      $region11: #{regnet_unit_forward.1} parent=5 // pred_region
        %s230 = ssub.s32 %s17, 1
        // Predicated region
        $region13: #{regnet_unit_forward.1} parent=11 // pred_check
          %p231 = pneg %p64
        $region14: #{regnet_unit_forward.1} parent=11 // pred_check_branch
          %233 = sbr.rel (%p231) target = $region16
        $region15: #{regnet_unit_forward.1} parent=11 // pred_region
          _
        $region16: #{regnet_unit_forward.1} parent=11 // pred_fallthru
          _
        // Predicated region
        $region17: #{regnet_unit_forward.1} parent=11 // pred_check
          %p234 = pneg %p85
        $region18: #{regnet_unit_forward.1} parent=11 // pred_check_branch
          %236 = sbr.rel (%p234) target = $region20
        $region19: #{regnet_unit_forward.1} parent=11 // pred_region
          _
        $region20: #{regnet_unit_forward.1} parent=11 // pred_fallthru
          _
        // Predicated region
        $region21: #{regnet_unit_forward.1} parent=11 // pred_check
          %p237 = pneg %p106
        $region22: #{regnet_unit_forward.1} parent=11 // pred_check_branch
          %239 = sbr.rel (%p237) target = $region24
        $region23: #{regnet_unit_forward.1} parent=11 // pred_region
          _
        $region24: #{regnet_unit_forward.1} parent=11 // pred_fallthru
          _
        // Predicated region
        $region25: #{regnet_unit_forward.1} parent=11 // pred_check
          %p240 = pneg %p127
        $region26: #{regnet_unit_forward.1} parent=11 // pred_check_branch
          %242 = sbr.rel (%p240) target = $region28
        $region27: #{regnet_unit_forward.1} parent=11 // pred_region
          _
        $region28: #{regnet_unit_forward.1} parent=11 // pred_fallthru
          _
        // Predicated region
        $region29: #{regnet_unit_forward.1} parent=11 // pred_check
          %p243 = pneg %p148
        $region30: #{regnet_unit_forward.1} parent=11 // pred_check_branch
          %245 = sbr.rel (%p243) target = $region32
        $region31: #{regnet_unit_forward.1} parent=11 // pred_region
          _
        $region32: #{regnet_unit_forward.1} parent=11 // pred_fallthru
          _
        // Predicated region
        $region33: #{regnet_unit_forward.1} parent=11 // pred_check
          %p246 = pneg %p169
        $region34: #{regnet_unit_forward.1} parent=11 // pred_check_branch
          %248 = sbr.rel (%p246) target = $region36
        $region35: #{regnet_unit_forward.1} parent=11 // pred_region
          _
        $region36: #{regnet_unit_forward.1} parent=11 // pred_fallthru
          _
        // Predicated region
        $region37: #{regnet_unit_forward.1} parent=11 // pred_check
          %p249 = pneg %p190
        $region38: #{regnet_unit_forward.1} parent=11 // pred_check_branch
          %251 = sbr.rel (%p249) target = $region40
        $region39: #{regnet_unit_forward.1} parent=11 // pred_region
          _
        $region40: #{regnet_unit_forward.1} parent=11 // pred_fallthru
          _
      $region12: #{regnet_unit_forward.1} parent=5 // pred_fallthru
        _
      %p252 = scmp.lt.s32.totalorder %s17, 2
      // Predicated region
      $region41: #{regnet_unit_forward.1} parent=5 // pred_check
        %p253 = pneg %p252
      $region42: #{regnet_unit_forward.1} parent=5 // pred_check_branch
        %255 = sbr.rel (%p253) target = $region44
      $region43: #{regnet_unit_forward.1} parent=5 // pred_region
        // Predicated region
        $region45: #{regnet_unit_forward.1} parent=43 // pred_check
          %p256 = pneg %p37
        $region46: #{regnet_unit_forward.1} parent=43 // pred_check_branch
          %258 = sbr.rel (%p256) target = $region48
        $region47: #{regnet_unit_forward.1} parent=43 // pred_region
          %p259 = scmp.lt.s32.totalorder %s17, 1
          %s260 = scalar_select %p259, %s17, 1
          %s261 = smul.addr %s260, 32
          %s262 = smul.addr %s261, 8
          %s263 = scalar_lea.vmem %s0, %s262
        $region48: #{regnet_unit_forward.1} parent=43 // pred_fallthru
          _
      $region44: #{regnet_unit_forward.1} parent=5 // pred_fallthru
        _
      %p264 = scmp.le.s32.totalorder 1, %s17
      %p265 = scmp.lt.s32.totalorder %s17, 3
      %p266 = pnand %p264, %p265
      %p267 = pneg %p266
      // Predicated region
      $region49: #{regnet_unit_forward.1} parent=5 // pred_check
        _
      $region50: #{regnet_unit_forward.1} parent=5 // pred_check_branch
        %269 = sbr.rel (%p266) target = $region52
      $region51: #{regnet_unit_forward.1} parent=5 // pred_region
        %s270 = ssub.s32 %s17, 1
        %p271 = scmp.lt.s32.totalorder %s22, 1
        %s272 = scalar_select %p271, %s22, 1
        %s273 = smul.addr %s272, 32
        %s274 = smul.addr %s273, 8
        %s275 = scalar_lea.vmem %s0, %s274
        %p276 = pneg %p43
        %p277 = pneg %p40
        %p278 = pneg %p64
        %p279 = pneg %p61
        %p280 = pneg %p85
        %p281 = pneg %p82
        %p282 = pneg %p106
        %p283 = pneg %p103
        %p284 = pneg %p127
        %p285 = pneg %p124
        %p286 = pneg %p148
        %p287 = pneg %p145
        %p288 = pneg %p169
        %p289 = pneg %p166
        %p290 = pneg %p190
        %p291 = pneg %p187
        %p292 = pneg %p216
        %p293 = pneg %p213
        %s294 = sand.u32 %s203, 1
        %s295 = scalar_lea.sflag [#allocation4], %s294
        %s296 = sand.u32 %s203, 1
        %s297 = smul.addr %s296, 64
        %s298 = scalar_lea.vmem [#allocation3], %s297
        %p299 = scmp.lt.s32.totalorder %s22, 1
        %s300 = scalar_select %p299, %s22, 1
        %s301 = smul.addr %s300, 32
        %s302 = smul.addr %s301, 8
        %s303 = scalar_lea.vmem %s0, %s302
        %v305 = vld [vmem:[%s303] sm:$0xff]
        %v306 = vld [vmem:[%s303 + $0x8] sm:$0xff]
        %v307 = vld [vmem:[%s303 + $0x10] sm:$0xff]
        %v308 = vld [vmem:[%s303 + $0x18] sm:$0xff]
        %v309 = vld [vmem:[%s303 + $0x20] sm:$0xff]
        %v310 = vld [vmem:[%s303 + $0x28] sm:$0xff]
        %v311 = vld [vmem:[%s303 + $0x30] sm:$0xff]
        %v312 = vld [vmem:[%s303 + $0x38] sm:$0xff]
        %v313 = vld [vmem:[%s303 + $0x40] sm:$0xff]
        %v314 = vld [vmem:[%s303 + $0x48] sm:$0xff]
        %v315 = vld [vmem:[%s303 + $0x50] sm:$0xff]
        %v316 = vld [vmem:[%s303 + $0x58] sm:$0xff]
        %v317 = vld [vmem:[%s303 + $0x60] sm:$0xff]
        %v318 = vld [vmem:[%s303 + $0x68] sm:$0xff]
        %v319 = vld [vmem:[%s303 + $0x70] sm:$0xff]
        %v320 = vld [vmem:[%s303 + $0x78] sm:$0xff]
        %v321 = vld [vmem:[%s303 + $0x80] sm:$0xff]
        %v322 = vld [vmem:[%s303 + $0x88] sm:$0xff]
        %v323 = vld [vmem:[%s303 + $0x90] sm:$0xff]
        %v324 = vld [vmem:[%s303 + $0x98] sm:$0xff]
        %v325 = vld [vmem:[%s303 + $0xa0] sm:$0xff]
        %v326 = vld [vmem:[%s303 + $0xa8] sm:$0xff]
        %v327 = vld [vmem:[%s303 + $0xb0] sm:$0xff]
        %v328 = vld [vmem:[%s303 + $0xb8] sm:$0xff]
        %v329 = vld [vmem:[%s303 + $0xc0] sm:$0xff]
        %v330 = vld [vmem:[%s303 + $0xc8] sm:$0xff]
        %v331 = vld [vmem:[%s303 + $0xd0] sm:$0xff]
        %v332 = vld [vmem:[%s303 + $0xd8] sm:$0xff]
        %v333 = vld [vmem:[%s303 + $0xe0] sm:$0xff]
        %v334 = vld [vmem:[%s303 + $0xe8] sm:$0xff]
        %v335 = vld [vmem:[%s303 + $0xf0] sm:$0xff]
        %v336 = vld [vmem:[%s303 + $0xf8] sm:$0xff]
        %v337 = vpack.c.bf16 %v306, %v305
        %v338 = vpack.c.bf16 %v308, %v307
        %v339 = vpack.c.bf16 %v310, %v309
        %v340 = vpack.c.bf16 %v312, %v311
        %v341 = vpack.c.bf16 %v314, %v313
        %v342 = vpack.c.bf16 %v316, %v315
        %v343 = vpack.c.bf16 %v318, %v317
        %v344 = vpack.c.bf16 %v320, %v319
        %v345 = vpack.c.bf16 %v322, %v321
        %v346 = vpack.c.bf16 %v324, %v323
        %v347 = vpack.c.bf16 %v326, %v325
        %v348 = vpack.c.bf16 %v328, %v327
        %v349 = vpack.c.bf16 %v330, %v329
        %v350 = vpack.c.bf16 %v332, %v331
        %v351 = vpack.c.bf16 %v334, %v333
        %v352 = vpack.c.bf16 %v336, %v335
        %v353 = vld [vmem:[%s1] sm:$0xf]
        %v354 = vld [vmem:[%s1 + $0x4] sm:$0xf]
        %v355 = vld [vmem:[%s2] sm:$0x1]
        %v357 = vlaneseq
        %v358 = vshrl.u32 %v357, 7
        %v359 = vsub.s32 0, %v358
        %v360 = vrot.slane %v355, %v359
        %v364 = vunpack.c.l.b16 %v353
        %v365 = vunpack.c.l.b16 %v354
        %v366 = vpack.c.b16 %v365, %v364
        %vm368 = vcmask 130048
        %v370 = vsel %vm368, %v337, 0
        %v373 = vsel %vm368, %v338, 0
        %v376 = vsel %vm368, %v339, 0
        %v379 = vsel %vm368, %v340, 0
        %v382 = vsel %vm368, %v341, 0
        %v385 = vsel %vm368, %v342, 0
        %v388 = vsel %vm368, %v343, 0
        %v391 = vsel %vm368, %v344, 0
        %v394 = vsel %vm368, %v345, 0
        %v397 = vsel %vm368, %v346, 0
        %v400 = vsel %vm368, %v347, 0
        %v403 = vsel %vm368, %v348, 0
        %v406 = vsel %vm368, %v349, 0
        %v409 = vsel %vm368, %v350, 0
        %v412 = vsel %vm368, %v351, 0
        %v415 = vsel %vm368, %v352, 0
        %417 = vmatprep.subr.bf16.mxu0 0
        %418 = vmatpush1.bf16.msra.mxu0 %v366
        %419 = vmatprep.subr.bf16.mxu0 0
        %420 = vmatpush1.bf16.msra.mxu0 0
        %421 = vmatprep.subr.bf16.mxu0 0
        %422 = vmatpush1.bf16.msra.mxu0 0
        %423 = vmatprep.subr.bf16.mxu0 0
        %424 = vmatpush1.bf16.msra.mxu0 0
        %425 = vmatprep.subr.bf16.mxu0 0
        %426 = vmatpush1.bf16.msra.mxu0 0
        %427 = vmatprep.subr.bf16.mxu0 0
        %428 = vmatpush1.bf16.msra.mxu0 0
        %429 = vmatprep.subr.bf16.mxu0 0
        %430 = vmatpush1.bf16.msra.mxu0 0
        %431 = vmatprep.subr.bf16.mxu0 0
        %432 = vmatpush1.bf16.msra.mxu0 0
        %433 = vmatprep.subr.bf16.mxu0 0
        %434 = vmatpush1.bf16.msra.mxu0 0
        %435 = vmatprep.subr.bf16.mxu0 0
        %436 = vmatpush1.bf16.msra.mxu0 0
        %437 = vmatprep.subr.bf16.mxu0 0
        %438 = vmatpush1.bf16.msra.mxu0 0
        %439 = vmatprep.subr.bf16.mxu0 0
        %440 = vmatpush1.bf16.msra.mxu0 0
        %441 = vmatprep.subr.bf16.mxu0 0
        %442 = vmatpush1.bf16.msra.mxu0 0
        %443 = vmatprep.subr.bf16.mxu0 0
        %444 = vmatpush1.bf16.msra.mxu0 0
        %445 = vmatprep.subr.bf16.mxu0 0
        %446 = vmatpush1.bf16.msra.mxu0 0
        %447 = vmatprep.subr.bf16.mxu0 0
        %448 = vmatpush1.bf16.msra.mxu0 0
        %449 = vmatprep.mubr.bf16.mxu0 0
        %450 = vmatmul.mubr.bf16.gmra.mrb[0].mxu0 %v370
        %v451 = vpop.f32.mrb[0].mxu0
        %v452 = vadd.f32 %v360, %v451
        %v453 = vpop.f32.mrb[0].mxu0
        %v454 = vpop.f32.mrb[0].mxu0
        %v455 = vadd.f32 %v360, %v454
        %v456 = vpop.f32.mrb[0].mxu0
        %457 = vmatprep.mubr.bf16.mxu0 0
        %458 = vmatmul.mubr.bf16.gmra.mrb[0].mxu0 %v373
        %v459 = vpop.f32.mrb[0].mxu0
        %v460 = vadd.f32 %v360, %v459
        %v461 = vpop.f32.mrb[0].mxu0
        %v462 = vpop.f32.mrb[0].mxu0
        %v463 = vadd.f32 %v360, %v462
        %v464 = vpop.f32.mrb[0].mxu0
        %465 = vmatprep.mubr.bf16.mxu0 0
        %466 = vmatmul.mubr.bf16.gmra.mrb[0].mxu0 %v376
        %v467 = vpop.f32.mrb[0].mxu0
        %v468 = vadd.f32 %v360, %v467
        %v469 = vpop.f32.mrb[0].mxu0
        %v470 = vpop.f32.mrb[0].mxu0
        %v471 = vadd.f32 %v360, %v470
        %v472 = vpop.f32.mrb[0].mxu0
        %473 = vmatprep.mubr.bf16.mxu0 0
        %474 = vmatmul.mubr.bf16.gmra.mrb[0].mxu0 %v379
        %v475 = vpop.f32.mrb[0].mxu0
        %v476 = vadd.f32 %v360, %v475
        %v477 = vpop.f32.mrb[0].mxu0
        %v478 = vpop.f32.mrb[0].mxu0
        %v479 = vadd.f32 %v360, %v478
        %v480 = vpop.f32.mrb[0].mxu0
        %481 = vmatprep.mubr.bf16.mxu0 0
        %482 = vmatmul.mubr.bf16.gmra.mrb[0].mxu0 %v382
        %v483 = vpop.f32.mrb[0].mxu0
        %v484 = vadd.f32 %v360, %v483
        %v485 = vpop.f32.mrb[0].mxu0
        %v486 = vpop.f32.mrb[0].mxu0
        %v487 = vadd.f32 %v360, %v486
        %v488 = vpop.f32.mrb[0].mxu0
        %489 = vmatprep.mubr.bf16.mxu0 0
        %490 = vmatmul.mubr.bf16.gmra.mrb[0].mxu0 %v385
        %v491 = vpop.f32.mrb[0].mxu0
        %v492 = vadd.f32 %v360, %v491
        %v493 = vpop.f32.mrb[0].mxu0
        %v494 = vpop.f32.mrb[0].mxu0
        %v495 = vadd.f32 %v360, %v494
        %v496 = vpop.f32.mrb[0].mxu0
        %497 = vmatprep.mubr.bf16.mxu0 0
        %498 = vmatmul.mubr.bf16.gmra.mrb[0].mxu0 %v388
        %v499 = vpop.f32.mrb[0].mxu0
        %v500 = vadd.f32 %v360, %v499
        %v501 = vpop.f32.mrb[0].mxu0
        %v502 = vpop.f32.mrb[0].mxu0
        %v503 = vadd.f32 %v360, %v502
        %v504 = vpop.f32.mrb[0].mxu0
        %505 = vmatprep.mubr.bf16.mxu0 0
        %506 = vmatmul.mubr.bf16.gmra.mrb[0].mxu0 %v391
        %v507 = vpop.f32.mrb[0].mxu0
        %v508 = vadd.f32 %v360, %v507
        %v509 = vpop.f32.mrb[0].mxu0
        %v510 = vpop.f32.mrb[0].mxu0
        %v511 = vadd.f32 %v360, %v510
        %v512 = vpop.f32.mrb[0].mxu0
        %513 = vmatprep.mubr.bf16.mxu0 0
        %514 = vmatmul.mubr.bf16.gmra.mrb[0].mxu0 %v394
        %v515 = vpop.f32.mrb[0].mxu0
        %v516 = vadd.f32 %v360, %v515
        %v517 = vpop.f32.mrb[0].mxu0
        %v518 = vpop.f32.mrb[0].mxu0
        %v519 = vadd.f32 %v360, %v518
        %v520 = vpop.f32.mrb[0].mxu0
        %521 = vmatprep.mubr.bf16.mxu0 0
        %522 = vmatmul.mubr.bf16.gmra.mrb[0].mxu0 %v397
        %v523 = vpop.f32.mrb[0].mxu0
        %v524 = vadd.f32 %v360, %v523
        %v525 = vpop.f32.mrb[0].mxu0
        %v526 = vpop.f32.mrb[0].mxu0
        %v527 = vadd.f32 %v360, %v526
        %v528 = vpop.f32.mrb[0].mxu0
        %529 = vmatprep.mubr.bf16.mxu0 0
        %530 = vmatmul.mubr.bf16.gmra.mrb[0].mxu0 %v400
        %v531 = vpop.f32.mrb[0].mxu0
        %v532 = vadd.f32 %v360, %v531
        %v533 = vpop.f32.mrb[0].mxu0
        %v534 = vpop.f32.mrb[0].mxu0
        %v535 = vadd.f32 %v360, %v534
        %v536 = vpop.f32.mrb[0].mxu0
        %537 = vmatprep.mubr.bf16.mxu0 0
        %538 = vmatmul.mubr.bf16.gmra.mrb[0].mxu0 %v403
        %v539 = vpop.f32.mrb[0].mxu0
        %v540 = vadd.f32 %v360, %v539
        %v541 = vpop.f32.mrb[0].mxu0
        %v542 = vpop.f32.mrb[0].mxu0
        %v543 = vadd.f32 %v360, %v542
        %v544 = vpop.f32.mrb[0].mxu0
        %545 = vmatprep.mubr.bf16.mxu0 0
        %546 = vmatmul.mubr.bf16.gmra.mrb[0].mxu0 %v406
        %v547 = vpop.f32.mrb[0].mxu0
        %v548 = vadd.f32 %v360, %v547
        %v549 = vpop.f32.mrb[0].mxu0
        %v550 = vpop.f32.mrb[0].mxu0
        %v551 = vadd.f32 %v360, %v550
        %v552 = vpop.f32.mrb[0].mxu0
        %553 = vmatprep.mubr.bf16.mxu0 0
        %554 = vmatmul.mubr.bf16.gmra.mrb[0].mxu0 %v409
        %v555 = vpop.f32.mrb[0].mxu0
        %v556 = vadd.f32 %v360, %v555
        %v557 = vpop.f32.mrb[0].mxu0
        %v558 = vpop.f32.mrb[0].mxu0
        %v559 = vadd.f32 %v360, %v558
        %v560 = vpop.f32.mrb[0].mxu0
        %561 = vmatprep.mubr.bf16.mxu0 0
        %562 = vmatmul.mubr.bf16.gmra.mrb[0].mxu0 %v412
        %v563 = vpop.f32.mrb[0].mxu0
        %v564 = vadd.f32 %v360, %v563
        %v565 = vpop.f32.mrb[0].mxu0
        %v566 = vpop.f32.mrb[0].mxu0
        %v567 = vadd.f32 %v360, %v566
        %v568 = vpop.f32.mrb[0].mxu0
        %569 = vmatprep.mubr.bf16.mxu0 0
        %570 = vmatmul.mubr.bf16.gmra.mrb[0].mxu0 %v415
        %v571 = vpop.f32.mrb[0].mxu0
        %v572 = vadd.f32 %v360, %v571
        %v573 = vpop.f32.mrb[0].mxu0
        %v574 = vpop.f32.mrb[0].mxu0
        %v575 = vadd.f32 %v360, %v574
        %v576 = vpop.f32.mrb[0].mxu0
        %577 = vdwg.mxu0
        %v578 = vmax.f32 %v452, 0.0
        %v579 = vmax.f32 %v455, 0.0
        %v580 = vmax.f32 %v460, 0.0
        %v581 = vmax.f32 %v463, 0.0
        %v582 = vmax.f32 %v468, 0.0
        %v583 = vmax.f32 %v471, 0.0
        %v584 = vmax.f32 %v476, 0.0
        %v585 = vmax.f32 %v479, 0.0
        %v586 = vmax.f32 %v484, 0.0
        %v587 = vmax.f32 %v487, 0.0
        %v588 = vmax.f32 %v492, 0.0
        %v589 = vmax.f32 %v495, 0.0
        %v590 = vmax.f32 %v500, 0.0
        %v591 = vmax.f32 %v503, 0.0
        %v592 = vmax.f32 %v508, 0.0
        %v593 = vmax.f32 %v511, 0.0
        %v594 = vmax.f32 %v516, 0.0
        %v595 = vmax.f32 %v519, 0.0
        %v596 = vmax.f32 %v524, 0.0
        %v597 = vmax.f32 %v527, 0.0
        %v598 = vmax.f32 %v532, 0.0
        %v599 = vmax.f32 %v535, 0.0
        %v600 = vmax.f32 %v540, 0.0
        %v601 = vmax.f32 %v543, 0.0
        %v602 = vmax.f32 %v548, 0.0
        %v603 = vmax.f32 %v551, 0.0
        %v604 = vmax.f32 %v556, 0.0
        %v605 = vmax.f32 %v559, 0.0
        %v606 = vmax.f32 %v564, 0.0
        %v607 = vmax.f32 %v567, 0.0
        %v608 = vmax.f32 %v572, 0.0
        %v609 = vmax.f32 %v575, 0.0
        %vm610 = vcmask 64512
        %611 = vst.msk [vmem:[#allocation2] sm:$0xff] %vm610, 0.0
        %612 = vst.msk [vmem:[#allocation2 + $0x8] sm:$0xff] %vm610, 0.0
        %613 = vst.msk [vmem:[#allocation2 + $0x10] sm:$0xff] %vm610, 0.0
        %s614 = scalar_lea.vmem [#allocation2], 408
        %615 = vst.msk [vmem:[%s614] sm:$0xff] %vm610, 0.0
        %616 = vst.msk [vmem:[%s614 + $0x8] sm:$0xff] %vm610, 0.0
        %617 = vst.msk [vmem:[%s614 + $0x10] sm:$0xff] %vm610, 0.0
        %vm618 = vcmask 57344
        %619 = vst.msk [vmem:[#allocation2] sm:$0x1] %vm618, 0.0
        %620 = vst.msk [vmem:[#allocation2 + $0x18] sm:$0x1] %vm618, 0.0
        %621 = vst.msk [vmem:[#allocation2 + $0x30] sm:$0x1] %vm618, 0.0
        %622 = vst.msk [vmem:[#allocation2 + $0x48] sm:$0x1] %vm618, 0.0
        %623 = vst.msk [vmem:[#allocation2 + $0x60] sm:$0x1] %vm618, 0.0
        %624 = vst.msk [vmem:[#allocation2 + $0x78] sm:$0x1] %vm618, 0.0
        %625 = vst.msk [vmem:[#allocation2 + $0x90] sm:$0x1] %vm618, 0.0
        %626 = vst.msk [vmem:[#allocation2 + $0xa8] sm:$0x1] %vm618, 0.0
        %627 = vst.msk [vmem:[#allocation2 + $0xc0] sm:$0x1] %vm618, 0.0
        %628 = vst.msk [vmem:[#allocation2 + $0xd8] sm:$0x1] %vm618, 0.0
        %629 = vst.msk [vmem:[#allocation2 + $0xf0] sm:$0x1] %vm618, 0.0
        %630 = vst.msk [vmem:[#allocation2 + $0x108] sm:$0x1] %vm618, 0.0
        %631 = vst.msk [vmem:[#allocation2 + $0x120] sm:$0x1] %vm618, 0.0
        %632 = vst.msk [vmem:[#allocation2 + $0x138] sm:$0x1] %vm618, 0.0
        %633 = vst.msk [vmem:[#allocation2 + $0x150] sm:$0x1] %vm618, 0.0
        %634 = vst.msk [vmem:[#allocation2 + $0x168] sm:$0x1] %vm618, 0.0
        %635 = vst.msk [vmem:[#allocation2 + $0x180] sm:$0x1] %vm618, 0.0
        %636 = vst.msk [vmem:[#allocation2 + $0x198] sm:$0x1] %vm618, 0.0
        %vm637 = vcmask 63488
        %638 = vst.msk [vmem:[#allocation2 + $0x11] sm:$0x7f] %vm637, 0.0
        %639 = vst.msk [vmem:[#allocation2 + $0x29] sm:$0x7f] %vm637, 0.0
        %640 = vst.msk [vmem:[#allocation2 + $0x41] sm:$0x7f] %vm637, 0.0
        %641 = vst.msk [vmem:[#allocation2 + $0x59] sm:$0x7f] %vm637, 0.0
        %642 = vst.msk [vmem:[#allocation2 + $0x71] sm:$0x7f] %vm637, 0.0
        %643 = vst.msk [vmem:[#allocation2 + $0x89] sm:$0x7f] %vm637, 0.0
        %644 = vst.msk [vmem:[#allocation2 + $0xa1] sm:$0x7f] %vm637, 0.0
        %645 = vst.msk [vmem:[#allocation2 + $0xb9] sm:$0x7f] %vm637, 0.0
        %646 = vst.msk [vmem:[#allocation2 + $0xd1] sm:$0x7f] %vm637, 0.0
        %647 = vst.msk [vmem:[#allocation2 + $0xe9] sm:$0x7f] %vm637, 0.0
        %648 = vst.msk [vmem:[#allocation2 + $0x101] sm:$0x7f] %vm637, 0.0
        %649 = vst.msk [vmem:[#allocation2 + $0x119] sm:$0x7f] %vm637, 0.0
        %650 = vst.msk [vmem:[#allocation2 + $0x131] sm:$0x7f] %vm637, 0.0
        %651 = vst.msk [vmem:[#allocation2 + $0x149] sm:$0x7f] %vm637, 0.0
        %652 = vst.msk [vmem:[#allocation2 + $0x161] sm:$0x7f] %vm637, 0.0
        %653 = vst.msk [vmem:[#allocation2 + $0x179] sm:$0x7f] %vm637, 0.0
        %654 = vst.msk [vmem:[#allocation2 + $0x191] sm:$0x7f] %vm637, 0.0
        %655 = vst.msk [vmem:[#allocation2 + $0x1a9] sm:$0x7f] %vm637, 0.0
        %s656 = scalar_lea.vmem [#allocation2], 24
        %657 = vst.msk [vmem:[%s656 + $0x1] sm:$0xff] %vm610, %v578
        %658 = vst.msk [vmem:[%s656 + $0x9] sm:$0xff] %vm610, %v579
        %659 = vst.msk [vmem:[%s656 + $0x19] sm:$0xff] %vm610, %v580
        %660 = vst.msk [vmem:[%s656 + $0x21] sm:$0xff] %vm610, %v581
        %661 = vst.msk [vmem:[%s656 + $0x31] sm:$0xff] %vm610, %v582
        %662 = vst.msk [vmem:[%s656 + $0x39] sm:$0xff] %vm610, %v583
        %663 = vst.msk [vmem:[%s656 + $0x49] sm:$0xff] %vm610, %v584
        %664 = vst.msk [vmem:[%s656 + $0x51] sm:$0xff] %vm610, %v585
        %665 = vst.msk [vmem:[%s656 + $0x61] sm:$0xff] %vm610, %v586
        %666 = vst.msk [vmem:[%s656 + $0x69] sm:$0xff] %vm610, %v587
        %667 = vst.msk [vmem:[%s656 + $0x79] sm:$0xff] %vm610, %v588
        %668 = vst.msk [vmem:[%s656 + $0x81] sm:$0xff] %vm610, %v589
        %669 = vst.msk [vmem:[%s656 + $0x91] sm:$0xff] %vm610, %v590
        %670 = vst.msk [vmem:[%s656 + $0x99] sm:$0xff] %vm610, %v591
        %671 = vst.msk [vmem:[%s656 + $0xa9] sm:$0xff] %vm610, %v592
        %672 = vst.msk [vmem:[%s656 + $0xb1] sm:$0xff] %vm610, %v593
        %673 = vst.msk [vmem:[%s656 + $0xc1] sm:$0xff] %vm610, %v594
        %674 = vst.msk [vmem:[%s656 + $0xc9] sm:$0xff] %vm610, %v595
        %675 = vst.msk [vmem:[%s656 + $0xd9] sm:$0xff] %vm610, %v596
        %676 = vst.msk [vmem:[%s656 + $0xe1] sm:$0xff] %vm610, %v597
        %677 = vst.msk [vmem:[%s656 + $0xf1] sm:$0xff] %vm610, %v598
        %678 = vst.msk [vmem:[%s656 + $0xf9] sm:$0xff] %vm610, %v599
        %679 = vst.msk [vmem:[%s656 + $0x109] sm:$0xff] %vm610, %v600
        %680 = vst.msk [vmem:[%s656 + $0x111] sm:$0xff] %vm610, %v601
        %681 = vst.msk [vmem:[%s656 + $0x121] sm:$0xff] %vm610, %v602
        %682 = vst.msk [vmem:[%s656 + $0x129] sm:$0xff] %vm610, %v603
        %683 = vst.msk [vmem:[%s656 + $0x139] sm:$0xff] %vm610, %v604
        %684 = vst.msk [vmem:[%s656 + $0x141] sm:$0xff] %vm610, %v605
        %685 = vst.msk [vmem:[%s656 + $0x151] sm:$0xff] %vm610, %v606
        %686 = vst.msk [vmem:[%s656 + $0x159] sm:$0xff] %vm610, %v607
        %687 = vst.msk [vmem:[%s656 + $0x169] sm:$0xff] %vm610, %v608
        %688 = vst.msk [vmem:[%s656 + $0x171] sm:$0xff] %vm610, %v609
        %v689 = vld [vmem:[#allocation2] ss:$2 sm:$0xff]
        %s690 = scalar_lea.vmem [#allocation2], 48
        %v691 = vld [vmem:[%s690] ss:$2 sm:$0xff]
        %s692 = scalar_lea.vmem [#allocation2], 96
        %v693 = vld [vmem:[%s692] ss:$2 sm:$0xff]
        %s694 = scalar_lea.vmem [#allocation2], 144
        %v695 = vld [vmem:[%s694] ss:$2 sm:$0xff]
        %s696 = scalar_lea.vmem [#allocation2], 192
        %v697 = vld [vmem:[%s696] ss:$2 sm:$0xff]
        %s698 = scalar_lea.vmem [#allocation2], 240
        %v699 = vld [vmem:[%s698] ss:$2 sm:$0xff]
        %s700 = scalar_lea.vmem [#allocation2], 288
        %v701 = vld [vmem:[%s700] ss:$2 sm:$0xff]
        %s702 = scalar_lea.vmem [#allocation2], 336
        %v703 = vld [vmem:[%s702] ss:$2 sm:$0xff]
        %v704 = vpack.c.bf16 %v691, %v689
        %v705 = vpack.c.bf16 %v695, %v693
        %v706 = vpack.c.bf16 %v699, %v697
        %v707 = vpack.c.bf16 %v703, %v701
        %v708 = vld [vmem:[%s3] sm:$0xf]
        %s709 = scalar_lea.vmem [#allocation2], 1
        %v710 = vld [vmem:[%s709] ss:$2 sm:$0xff]
        %s711 = scalar_lea.vmem [#allocation2], 49
        %v712 = vld [vmem:[%s711] ss:$2 sm:$0xff]
        %s713 = scalar_lea.vmem [#allocation2], 97
        %v714 = vld [vmem:[%s713] ss:$2 sm:$0xff]
        %s715 = scalar_lea.vmem [#allocation2], 145
        %v716 = vld [vmem:[%s715] ss:$2 sm:$0xff]
        %s717 = scalar_lea.vmem [#allocation2], 193
        %v718 = vld [vmem:[%s717] ss:$2 sm:$0xff]
        %s719 = scalar_lea.vmem [#allocation2], 241
        %v720 = vld [vmem:[%s719] ss:$2 sm:$0xff]
        %s721 = scalar_lea.vmem [#allocation2], 289
        %v722 = vld [vmem:[%s721] ss:$2 sm:$0xff]
        %s723 = scalar_lea.vmem [#allocation2], 337
        %v724 = vld [vmem:[%s723] ss:$2 sm:$0xff]
        %v725 = vpack.c.bf16 %v712, %v710
        %v726 = vpack.c.bf16 %v716, %v714
        %v727 = vpack.c.bf16 %v720, %v718
        %v728 = vpack.c.bf16 %v724, %v722
        %s729 = scalar_lea.vmem %s3, 4
        %v730 = vld [vmem:[%s729] sm:$0xf]
        %v732 = vsel %vm610, %v725, 0
        %v735 = vsel %vm610, %v726, 0
        %v738 = vsel %vm610, %v727, 0
        %v741 = vsel %vm610, %v728, 0
        %vm743 = vcmask 1043456
        %v745 = vsel %vm743, %v730, 0
        %747 = vmatprep.subr.bf16.mxu0 0
        %748 = vmatpush1.bf16.msra.mxu0 %v745
        %749 = vmatprep.subr.bf16.mxu0 0
        %750 = vmatpush1.bf16.msra.mxu0 0
        %751 = vmatprep.subr.bf16.mxu0 0
        %752 = vmatpush1.bf16.msra.mxu0 0
        %753 = vmatprep.subr.bf16.mxu0 0
        %754 = vmatpush1.bf16.msra.mxu0 0
        %755 = vmatprep.subr.bf16.mxu0 0
        %756 = vmatpush1.bf16.msra.mxu0 0
        %757 = vmatprep.subr.bf16.mxu0 0
        %758 = vmatpush1.bf16.msra.mxu0 0
        %759 = vmatprep.subr.bf16.mxu0 0
        %760 = vmatpush1.bf16.msra.mxu0 0
        %761 = vmatprep.subr.bf16.mxu0 0
        %762 = vmatpush1.bf16.msra.mxu0 0
        %763 = vmatprep.subr.bf16.mxu0 0
        %764 = vmatpush1.bf16.msra.mxu0 0
        %765 = vmatprep.subr.bf16.mxu0 0
        %766 = vmatpush1.bf16.msra.mxu0 0
        %767 = vmatprep.subr.bf16.mxu0 0
        %768 = vmatpush1.bf16.msra.mxu0 0
        %769 = vmatprep.subr.bf16.mxu0 0
        %770 = vmatpush1.bf16.msra.mxu0 0
        %771 = vmatprep.subr.bf16.mxu0 0
        %772 = vmatpush1.bf16.msra.mxu0 0
        %773 = vmatprep.subr.bf16.mxu0 0
        %774 = vmatpush1.bf16.msra.mxu0 0
        %775 = vmatprep.subr.bf16.mxu0 0
        %776 = vmatpush1.bf16.msra.mxu0 0
        %777 = vmatprep.subr.bf16.mxu0 0
        %778 = vmatpush1.bf16.msra.mxu0 0
        %779 = vmatprep.mubr.bf16.mxu0 0
        %780 = vmatmul.mubr.bf16.gmra.mrb[0].mxu0 %v732
        %v781 = vpop.f32.mrb[0].mxu0
        %v782 = vadd.f32 0.0, %v781
        %v783 = vpop.f32.mrb[0].mxu0
        %v784 = vpop.f32.mrb[0].mxu0
        %v785 = vadd.f32 0.0, %v784
        %v786 = vpop.f32.mrb[0].mxu0
        %787 = vmatprep.mubr.bf16.mxu0 0
        %788 = vmatmul.mubr.bf16.gmra.mrb[0].mxu0 %v735
        %v789 = vpop.f32.mrb[0].mxu0
        %v790 = vadd.f32 0.0, %v789
        %v791 = vpop.f32.mrb[0].mxu0
        %v792 = vpop.f32.mrb[0].mxu0
        %v793 = vadd.f32 0.0, %v792
        %v794 = vpop.f32.mrb[0].mxu0
        %795 = vmatprep.mubr.bf16.mxu0 0
        %796 = vmatmul.mubr.bf16.gmra.mrb[0].mxu0 %v738
        %v797 = vpop.f32.mrb[0].mxu0
        %v798 = vadd.f32 0.0, %v797
        %v799 = vpop.f32.mrb[0].mxu0
        %v800 = vpop.f32.mrb[0].mxu0
        %v801 = vadd.f32 0.0, %v800
        %v802 = vpop.f32.mrb[0].mxu0
        %803 = vmatprep.mubr.bf16.mxu0 0
        %804 = vmatmul.mubr.bf16.gmra.mrb[0].mxu0 %v741
        %v805 = vpop.f32.mrb[0].mxu0
        %v806 = vadd.f32 0.0, %v805
        %v807 = vpop.f32.mrb[0].mxu0
        %v808 = vpop.f32.mrb[0].mxu0
        %v809 = vadd.f32 0.0, %v808
        %v810 = vpop.f32.mrb[0].mxu0
        %811 = vdwg.mxu0
        %v813 = vsel %vm610, %v704, 0
        %v816 = vsel %vm610, %v705, 0
        %v819 = vsel %vm610, %v706, 0
        %v822 = vsel %vm610, %v707, 0
        %v825 = vsel %vm743, %v708, 0
        %827 = vmatprep.subr.bf16.mxu0 0
        %828 = vmatpush1.bf16.msra.mxu0 %v825
        %829 = vmatprep.subr.bf16.mxu0 0
        %830 = vmatpush1.bf16.msra.mxu0 0
        %831 = vmatprep.subr.bf16.mxu0 0
        %832 = vmatpush1.bf16.msra.mxu0 0
        %833 = vmatprep.subr.bf16.mxu0 0
        %834 = vmatpush1.bf16.msra.mxu0 0
        %835 = vmatprep.subr.bf16.mxu0 0
        %836 = vmatpush1.bf16.msra.mxu0 0
        %837 = vmatprep.subr.bf16.mxu0 0
        %838 = vmatpush1.bf16.msra.mxu0 0
        %839 = vmatprep.subr.bf16.mxu0 0
        %840 = vmatpush1.bf16.msra.mxu0 0
        %841 = vmatprep.subr.bf16.mxu0 0
        %842 = vmatpush1.bf16.msra.mxu0 0
        %843 = vmatprep.subr.bf16.mxu0 0
        %844 = vmatpush1.bf16.msra.mxu0 0
        %845 = vmatprep.subr.bf16.mxu0 0
        %846 = vmatpush1.bf16.msra.mxu0 0
        %847 = vmatprep.subr.bf16.mxu0 0
        %848 = vmatpush1.bf16.msra.mxu0 0
        %849 = vmatprep.subr.bf16.mxu0 0
        %850 = vmatpush1.bf16.msra.mxu0 0
        %851 = vmatprep.subr.bf16.mxu0 0
        %852 = vmatpush1.bf16.msra.mxu0 0
        %853 = vmatprep.subr.bf16.mxu0 0
        %854 = vmatpush1.bf16.msra.mxu0 0
        %855 = vmatprep.subr.bf16.mxu0 0
        %856 = vmatpush1.bf16.msra.mxu0 0
        %857 = vmatprep.subr.bf16.mxu0 0
        %858 = vmatpush1.bf16.msra.mxu0 0
        %859 = vmatprep.mubr.bf16.mxu0 0
        %860 = vmatmul.mubr.bf16.gmra.mrb[0].mxu0 %v813
        %v861 = vpop.f32.mrb[0].mxu0
        %v862 = vadd.f32 %v782, %v861
        %v863 = vpop.f32.mrb[0].mxu0
        %v864 = vpop.f32.mrb[0].mxu0
        %v865 = vadd.f32 %v785, %v864
        %v866 = vpop.f32.mrb[0].mxu0
        %867 = vmatprep.mubr.bf16.mxu0 0
        %868 = vmatmul.mubr.bf16.gmra.mrb[0].mxu0 %v816
        %v869 = vpop.f32.mrb[0].mxu0
        %v870 = vadd.f32 %v790, %v869
        %v871 = vpop.f32.mrb[0].mxu0
        %v872 = vpop.f32.mrb[0].mxu0
        %v873 = vadd.f32 %v793, %v872
        %v874 = vpop.f32.mrb[0].mxu0
        %875 = vmatprep.mubr.bf16.mxu0 0
        %876 = vmatmul.mubr.bf16.gmra.mrb[0].mxu0 %v819
        %v877 = vpop.f32.mrb[0].mxu0
        %v878 = vadd.f32 %v798, %v877
        %v879 = vpop.f32.mrb[0].mxu0
        %v880 = vpop.f32.mrb[0].mxu0
        %v881 = vadd.f32 %v801, %v880
        %v882 = vpop.f32.mrb[0].mxu0
        %883 = vmatprep.mubr.bf16.mxu0 0
        %884 = vmatmul.mubr.bf16.gmra.mrb[0].mxu0 %v822
        %v885 = vpop.f32.mrb[0].mxu0
        %v886 = vadd.f32 %v806, %v885
        %v887 = vpop.f32.mrb[0].mxu0
        %v888 = vpop.f32.mrb[0].mxu0
        %v889 = vadd.f32 %v809, %v888
        %v890 = vpop.f32.mrb[0].mxu0
        %891 = vdwg.mxu0
        %s892 = scalar_lea.vmem [#allocation2], 2
        %v893 = vld [vmem:[%s892] ss:$2 sm:$0xff]
        %s894 = scalar_lea.vmem [#allocation2], 50
        %v895 = vld [vmem:[%s894] ss:$2 sm:$0xff]
        %s896 = scalar_lea.vmem [#allocation2], 98
        %v897 = vld [vmem:[%s896] ss:$2 sm:$0xff]
        %s898 = scalar_lea.vmem [#allocation2], 146
        %v899 = vld [vmem:[%s898] ss:$2 sm:$0xff]
        %s900 = scalar_lea.vmem [#allocation2], 194
        %v901 = vld [vmem:[%s900] ss:$2 sm:$0xff]
        %s902 = scalar_lea.vmem [#allocation2], 242
        %v903 = vld [vmem:[%s902] ss:$2 sm:$0xff]
        %s904 = scalar_lea.vmem [#allocation2], 290
        %v905 = vld [vmem:[%s904] ss:$2 sm:$0xff]
        %s906 = scalar_lea.vmem [#allocation2], 338
        %v907 = vld [vmem:[%s906] ss:$2 sm:$0xff]
        %v908 = vpack.c.bf16 %v895, %v893
        %v909 = vpack.c.bf16 %v899, %v897
        %v910 = vpack.c.bf16 %v903, %v901
        %v911 = vpack.c.bf16 %v907, %v905
        %s912 = scalar_lea.vmem %s3, 8
        %v913 = vld [vmem:[%s912] sm:$0xf]
        %v915 = vsel %vm610, %v908, 0
        %v918 = vsel %vm610, %v909, 0
        %v921 = vsel %vm610, %v910, 0
        %v924 = vsel %vm610, %v911, 0
        %v927 = vsel %vm743, %v913, 0
        %929 = vmatprep.subr.bf16.mxu0 0
        %930 = vmatpush1.bf16.msra.mxu0 %v927
        %931 = vmatprep.subr.bf16.mxu0 0
        %932 = vmatpush1.bf16.msra.mxu0 0
        %933 = vmatprep.subr.bf16.mxu0 0
        %934 = vmatpush1.bf16.msra.mxu0 0
        %935 = vmatprep.subr.bf16.mxu0 0
        %936 = vmatpush1.bf16.msra.mxu0 0
        %937 = vmatprep.subr.bf16.mxu0 0
        %938 = vmatpush1.bf16.msra.mxu0 0
        %939 = vmatprep.subr.bf16.mxu0 0
        %940 = vmatpush1.bf16.msra.mxu0 0
        %941 = vmatprep.subr.bf16.mxu0 0
        %942 = vmatpush1.bf16.msra.mxu0 0
        %943 = vmatprep.subr.bf16.mxu0 0
        %944 = vmatpush1.bf16.msra.mxu0 0
        %945 = vmatprep.subr.bf16.mxu0 0
        %946 = vmatpush1.bf16.msra.mxu0 0
        %947 = vmatprep.subr.bf16.mxu0 0
        %948 = vmatpush1.bf16.msra.mxu0 0
        %949 = vmatprep.subr.bf16.mxu0 0
        %950 = vmatpush1.bf16.msra.mxu0 0
        %951 = vmatprep.subr.bf16.mxu0 0
        %952 = vmatpush1.bf16.msra.mxu0 0
        %953 = vmatprep.subr.bf16.mxu0 0
        %954 = vmatpush1.bf16.msra.mxu0 0
        %955 = vmatprep.subr.bf16.mxu0 0
        %956 = vmatpush1.bf16.msra.mxu0 0
        %957 = vmatprep.subr.bf16.mxu0 0
        %958 = vmatpush1.bf16.msra.mxu0 0
        %959 = vmatprep.subr.bf16.mxu0 0
        %960 = vmatpush1.bf16.msra.mxu0 0
        %961 = vmatprep.mubr.bf16.mxu0 0
        %962 = vmatmul.mubr.bf16.gmra.mrb[0].mxu0 %v915
        %v963 = vpop.f32.mrb[0].mxu0
        %v964 = vadd.f32 0.0, %v963
        %v965 = vpop.f32.mrb[0].mxu0
        %v966 = vpop.f32.mrb[0].mxu0
        %v967 = vadd.f32 0.0, %v966
        %v968 = vpop.f32.mrb[0].mxu0
        %969 = vmatprep.mubr.bf16.mxu0 0
        %970 = vmatmul.mubr.bf16.gmra.mrb[0].mxu0 %v918
        %v971 = vpop.f32.mrb[0].mxu0
        %v972 = vadd.f32 0.0, %v971
        %v973 = vpop.f32.mrb[0].mxu0
        %v974 = vpop.f32.mrb[0].mxu0
        %v975 = vadd.f32 0.0, %v974
        %v976 = vpop.f32.mrb[0].mxu0
        %977 = vmatprep.mubr.bf16.mxu0 0
        %978 = vmatmul.mubr.bf16.gmra.mrb[0].mxu0 %v921
        %v979 = vpop.f32.mrb[0].mxu0
        %v980 = vadd.f32 0.0, %v979
        %v981 = vpop.f32.mrb[0].mxu0
        %v982 = vpop.f32.mrb[0].mxu0
        %v983 = vadd.f32 0.0, %v982
        %v984 = vpop.f32.mrb[0].mxu0
        %985 = vmatprep.mubr.bf16.mxu0 0
        %986 = vmatmul.mubr.bf16.gmra.mrb[0].mxu0 %v924
        %v987 = vpop.f32.mrb[0].mxu0
        %v988 = vadd.f32 0.0, %v987
        %v989 = vpop.f32.mrb[0].mxu0
        %v990 = vpop.f32.mrb[0].mxu0
        %v991 = vadd.f32 0.0, %v990
        %v992 = vpop.f32.mrb[0].mxu0
        %993 = vdwg.mxu0
        %v994 = vadd.f32 %v862, %v964
        %v995 = vadd.f32 %v865, %v967
        %v996 = vadd.f32 %v870, %v972
        %v997 = vadd.f32 %v873, %v975
        %v998 = vadd.f32 %v878, %v980
        %v999 = vadd.f32 %v881, %v983
        %v1000 = vadd.f32 %v886, %v988
        %v1001 = vadd.f32 %v889, %v991
        %v1002 = vld [vmem:[%s656] ss:$2 sm:$0xff]
        %s1003 = scalar_lea.vmem %s656, 48 [#allocation2]
        %v1004 = vld [vmem:[%s1003] ss:$2 sm:$0xff]
        %s1005 = scalar_lea.vmem %s656, 96 [#allocation2]
        %v1006 = vld [vmem:[%s1005] ss:$2 sm:$0xff]
        %s1007 = scalar_lea.vmem %s656, 144 [#allocation2]
        %v1008 = vld [vmem:[%s1007] ss:$2 sm:$0xff]
        %s1009 = scalar_lea.vmem %s656, 192 [#allocation2]
        %v1010 = vld [vmem:[%s1009] ss:$2 sm:$0xff]
        %s1011 = scalar_lea.vmem %s656, 240 [#allocation2]
        %v1012 = vld [vmem:[%s1011] ss:$2 sm:$0xff]
        %s1013 = scalar_lea.vmem %s656, 288 [#allocation2]
        %v1014 = vld [vmem:[%s1013] ss:$2 sm:$0xff]
        %s1015 = scalar_lea.vmem %s656, 336 [#allocation2]
        %v1016 = vld [vmem:[%s1015] ss:$2 sm:$0xff]
        %v1017 = vpack.c.bf16 %v1004, %v1002
        %v1018 = vpack.c.bf16 %v1008, %v1006
        %v1019 = vpack.c.bf16 %v1012, %v1010
        %v1020 = vpack.c.bf16 %v1016, %v1014
        %s1021 = scalar_lea.vmem %s3, 12
        %v1022 = vld [vmem:[%s1021] sm:$0xf]
        %v1024 = vsel %vm610, %v1017, 0
        %v1027 = vsel %vm610, %v1018, 0
        %v1030 = vsel %vm610, %v1019, 0
        %v1033 = vsel %vm610, %v1020, 0
        %v1036 = vsel %vm743, %v1022, 0
        %1038 = vmatprep.subr.bf16.mxu0 0
        %1039 = vmatpush1.bf16.msra.mxu0 %v1036
        %1040 = vmatprep.subr.bf16.mxu0 0
        %1041 = vmatpush1.bf16.msra.mxu0 0
        %1042 = vmatprep.subr.bf16.mxu0 0
        %1043 = vmatpush1.bf16.msra.mxu0 0
        %1044 = vmatprep.subr.bf16.mxu0 0
        %1045 = vmatpush1.bf16.msra.mxu0 0
        %1046 = vmatprep.subr.bf16.mxu0 0
        %1047 = vmatpush1.bf16.msra.mxu0 0
        %1048 = vmatprep.subr.bf16.mxu0 0
        %1049 = vmatpush1.bf16.msra.mxu0 0
        %1050 = vmatprep.subr.bf16.mxu0 0
        %1051 = vmatpush1.bf16.msra.mxu0 0
        %1052 = vmatprep.subr.bf16.mxu0 0
        %1053 = vmatpush1.bf16.msra.mxu0 0
        %1054 = vmatprep.subr.bf16.mxu0 0
        %1055 = vmatpush1.bf16.msra.mxu0 0
        %1056 = vmatprep.subr.bf16.mxu0 0
        %1057 = vmatpush1.bf16.msra.mxu0 0
        %1058 = vmatprep.subr.bf16.mxu0 0
        %1059 = vmatpush1.bf16.msra.mxu0 0
        %1060 = vmatprep.subr.bf16.mxu0 0
        %1061 = vmatpush1.bf16.msra.mxu0 0
        %1062 = vmatprep.subr.bf16.mxu0 0
        %1063 = vmatpush1.bf16.msra.mxu0 0
        %1064 = vmatprep.subr.bf16.mxu0 0
        %1065 = vmatpush1.bf16.msra.mxu0 0
        %1066 = vmatprep.subr.bf16.mxu0 0
        %1067 = vmatpush1.bf16.msra.mxu0 0
        %1068 = vmatprep.subr.bf16.mxu0 0
        %1069 = vmatpush1.bf16.msra.mxu0 0
        %1070 = vmatprep.mubr.bf16.mxu0 0
        %1071 = vmatmul.mubr.bf16.gmra.mrb[0].mxu0 %v1024
        %v1072 = vpop.f32.mrb[0].mxu0
        %v1073 = vadd.f32 0.0, %v1072
        %v1074 = vpop.f32.mrb[0].mxu0
        %v1075 = vpop.f32.mrb[0].mxu0
        %v1076 = vadd.f32 0.0, %v1075
        %v1077 = vpop.f32.mrb[0].mxu0
        %1078 = vmatprep.mubr.bf16.mxu0 0
        %1079 = vmatmul.mubr.bf16.gmra.mrb[0].mxu0 %v1027
        %v1080 = vpop.f32.mrb[0].mxu0
        %v1081 = vadd.f32 0.0, %v1080
        %v1082 = vpop.f32.mrb[0].mxu0
        %v1083 = vpop.f32.mrb[0].mxu0
        %v1084 = vadd.f32 0.0, %v1083
        %v1085 = vpop.f32.mrb[0].mxu0
        %1086 = vmatprep.mubr.bf16.mxu0 0
        %1087 = vmatmul.mubr.bf16.gmra.mrb[0].mxu0 %v1030
        %v1088 = vpop.f32.mrb[0].mxu0
        %v1089 = vadd.f32 0.0, %v1088
        %v1090 = vpop.f32.mrb[0].mxu0
        %v1091 = vpop.f32.mrb[0].mxu0
        %v1092 = vadd.f32 0.0, %v1091
        %v1093 = vpop.f32.mrb[0].mxu0
        %1094 = vmatprep.mubr.bf16.mxu0 0
        %1095 = vmatmul.mubr.bf16.gmra.mrb[0].mxu0 %v1033
        %v1096 = vpop.f32.mrb[0].mxu0
        %v1097 = vadd.f32 0.0, %v1096
        %v1098 = vpop.f32.mrb[0].mxu0
        %v1099 = vpop.f32.mrb[0].mxu0
        %v1100 = vadd.f32 0.0, %v1099
        %v1101 = vpop.f32.mrb[0].mxu0
        %1102 = vdwg.mxu0
        %v1103 = vadd.f32 %v994, %v1073
        %v1104 = vadd.f32 %v995, %v1076
        %v1105 = vadd.f32 %v996, %v1081
        %v1106 = vadd.f32 %v997, %v1084
        %v1107 = vadd.f32 %v998, %v1089
        %v1108 = vadd.f32 %v999, %v1092
        %v1109 = vadd.f32 %v1000, %v1097
        %v1110 = vadd.f32 %v1001, %v1100
        %s1111 = scalar_lea.vmem %s656, 1 [#allocation2]
        %v1112 = vld [vmem:[%s1111] ss:$2 sm:$0xff]
        %s1113 = scalar_lea.vmem %s656, 49 [#allocation2]
        %v1114 = vld [vmem:[%s1113] ss:$2 sm:$0xff]
        %s1115 = scalar_lea.vmem %s656, 97 [#allocation2]
        %v1116 = vld [vmem:[%s1115] ss:$2 sm:$0xff]
        %s1117 = scalar_lea.vmem %s656, 145 [#allocation2]
        %v1118 = vld [vmem:[%s1117] ss:$2 sm:$0xff]
        %s1119 = scalar_lea.vmem %s656, 193 [#allocation2]
        %v1120 = vld [vmem:[%s1119] ss:$2 sm:$0xff]
        %s1121 = scalar_lea.vmem %s656, 241 [#allocation2]
        %v1122 = vld [vmem:[%s1121] ss:$2 sm:$0xff]
        %s1123 = scalar_lea.vmem %s656, 289 [#allocation2]
        %v1124 = vld [vmem:[%s1123] ss:$2 sm:$0xff]
        %s1125 = scalar_lea.vmem %s656, 337 [#allocation2]
        %v1126 = vld [vmem:[%s1125] ss:$2 sm:$0xff]
        %v1127 = vpack.c.bf16 %v1114, %v1112
        %v1128 = vpack.c.bf16 %v1118, %v1116
        %v1129 = vpack.c.bf16 %v1122, %v1120
        %v1130 = vpack.c.bf16 %v1126, %v1124
        %s1131 = scalar_lea.vmem %s3, 16
        %v1132 = vld [vmem:[%s1131] sm:$0xf]
        %v1134 = vsel %vm610, %v1127, 0
        %v1137 = vsel %vm610, %v1128, 0
        %v1140 = vsel %vm610, %v1129, 0
        %v1143 = vsel %vm610, %v1130, 0
        %v1146 = vsel %vm743, %v1132, 0
        %1148 = vmatprep.subr.bf16.mxu0 0
        %1149 = vmatpush1.bf16.msra.mxu0 %v1146
        %1150 = vmatprep.subr.bf16.mxu0 0
        %1151 = vmatpush1.bf16.msra.mxu0 0
        %1152 = vmatprep.subr.bf16.mxu0 0
        %1153 = vmatpush1.bf16.msra.mxu0 0
        %1154 = vmatprep.subr.bf16.mxu0 0
        %1155 = vmatpush1.bf16.msra.mxu0 0
        %1156 = vmatprep.subr.bf16.mxu0 0
        %1157 = vmatpush1.bf16.msra.mxu0 0
        %1158 = vmatprep.subr.bf16.mxu0 0
        %1159 = vmatpush1.bf16.msra.mxu0 0
        %1160 = vmatprep.subr.bf16.mxu0 0
        %1161 = vmatpush1.bf16.msra.mxu0 0
        %1162 = vmatprep.subr.bf16.mxu0 0
        %1163 = vmatpush1.bf16.msra.mxu0 0
        %1164 = vmatprep.subr.bf16.mxu0 0
        %1165 = vmatpush1.bf16.msra.mxu0 0
        %1166 = vmatprep.subr.bf16.mxu0 0
        %1167 = vmatpush1.bf16.msra.mxu0 0
        %1168 = vmatprep.subr.bf16.mxu0 0
        %1169 = vmatpush1.bf16.msra.mxu0 0
        %1170 = vmatprep.subr.bf16.mxu0 0
        %1171 = vmatpush1.bf16.msra.mxu0 0
        %1172 = vmatprep.subr.bf16.mxu0 0
        %1173 = vmatpush1.bf16.msra.mxu0 0
        %1174 = vmatprep.subr.bf16.mxu0 0
        %1175 = vmatpush1.bf16.msra.mxu0 0
        %1176 = vmatprep.subr.bf16.mxu0 0
        %1177 = vmatpush1.bf16.msra.mxu0 0
        %1178 = vmatprep.subr.bf16.mxu0 0
        %1179 = vmatpush1.bf16.msra.mxu0 0
        %1180 = vmatprep.mubr.bf16.mxu0 0
        %1181 = vmatmul.mubr.bf16.gmra.mrb[0].mxu0 %v1134
        %v1182 = vpop.f32.mrb[0].mxu0
        %v1183 = vadd.f32 0.0, %v1182
        %v1184 = vpop.f32.mrb[0].mxu0
        %v1185 = vpop.f32.mrb[0].mxu0
        %v1186 = vadd.f32 0.0, %v1185
        %v1187 = vpop.f32.mrb[0].mxu0
        %1188 = vmatprep.mubr.bf16.mxu0 0
        %1189 = vmatmul.mubr.bf16.gmra.mrb[0].mxu0 %v1137
        %v1190 = vpop.f32.mrb[0].mxu0
        %v1191 = vadd.f32 0.0, %v1190
        %v1192 = vpop.f32.mrb[0].mxu0
        %v1193 = vpop.f32.mrb[0].mxu0
        %v1194 = vadd.f32 0.0, %v1193
        %v1195 = vpop.f32.mrb[0].mxu0
        %1196 = vmatprep.mubr.bf16.mxu0 0
        %1197 = vmatmul.mubr.bf16.gmra.mrb[0].mxu0 %v1140
        %v1198 = vpop.f32.mrb[0].mxu0
        %v1199 = vadd.f32 0.0, %v1198
        %v1200 = vpop.f32.mrb[0].mxu0
        %v1201 = vpop.f32.mrb[0].mxu0
        %v1202 = vadd.f32 0.0, %v1201
        %v1203 = vpop.f32.mrb[0].mxu0
        %1204 = vmatprep.mubr.bf16.mxu0 0
        %1205 = vmatmul.mubr.bf16.gmra.mrb[0].mxu0 %v1143
        %v1206 = vpop.f32.mrb[0].mxu0
        %v1207 = vadd.f32 0.0, %v1206
        %v1208 = vpop.f32.mrb[0].mxu0
        %v1209 = vpop.f32.mrb[0].mxu0
        %v1210 = vadd.f32 0.0, %v1209
        %v1211 = vpop.f32.mrb[0].mxu0
        %1212 = vdwg.mxu0
        %v1213 = vadd.f32 %v1103, %v1183
        %v1214 = vadd.f32 %v1104, %v1186
        %v1215 = vadd.f32 %v1105, %v1191
        %v1216 = vadd.f32 %v1106, %v1194
        %v1217 = vadd.f32 %v1107, %v1199
        %v1218 = vadd.f32 %v1108, %v1202
        %v1219 = vadd.f32 %v1109, %v1207
        %v1220 = vadd.f32 %v1110, %v1210
        %s1221 = scalar_lea.vmem %s656, 2 [#allocation2]
        %v1222 = vld [vmem:[%s1221] ss:$2 sm:$0xff]
        %s1223 = scalar_lea.vmem %s656, 50 [#allocation2]
        %v1224 = vld [vmem:[%s1223] ss:$2 sm:$0xff]
        %s1225 = scalar_lea.vmem %s656, 98 [#allocation2]
        %v1226 = vld [vmem:[%s1225] ss:$2 sm:$0xff]
        %s1227 = scalar_lea.vmem %s656, 146 [#allocation2]
        %v1228 = vld [vmem:[%s1227] ss:$2 sm:$0xff]
        %s1229 = scalar_lea.vmem %s656, 194 [#allocation2]
        %v1230 = vld [vmem:[%s1229] ss:$2 sm:$0xff]
        %s1231 = scalar_lea.vmem %s656, 242 [#allocation2]
        %v1232 = vld [vmem:[%s1231] ss:$2 sm:$0xff]
        %s1233 = scalar_lea.vmem %s656, 290 [#allocation2]
        %v1234 = vld [vmem:[%s1233] ss:$2 sm:$0xff]
        %s1235 = scalar_lea.vmem %s656, 338 [#allocation2]
        %v1236 = vld [vmem:[%s1235] ss:$2 sm:$0xff]
        %v1237 = vpack.c.bf16 %v1224, %v1222
        %v1238 = vpack.c.bf16 %v1228, %v1226
        %v1239 = vpack.c.bf16 %v1232, %v1230
        %v1240 = vpack.c.bf16 %v1236, %v1234
        %s1241 = scalar_lea.vmem %s3, 20
        %v1242 = vld [vmem:[%s1241] sm:$0xf]
        %v1244 = vsel %vm610, %v1237, 0
        %v1247 = vsel %vm610, %v1238, 0
        %v1250 = vsel %vm610, %v1239, 0
        %v1253 = vsel %vm610, %v1240, 0
        %v1256 = vsel %vm743, %v1242, 0
        %1258 = vmatprep.subr.bf16.mxu0 0
        %1259 = vmatpush1.bf16.msra.mxu0 %v1256
        %1260 = vmatprep.subr.bf16.mxu0 0
        %1261 = vmatpush1.bf16.msra.mxu0 0
        %1262 = vmatprep.subr.bf16.mxu0 0
        %1263 = vmatpush1.bf16.msra.mxu0 0
        %1264 = vmatprep.subr.bf16.mxu0 0
        %1265 = vmatpush1.bf16.msra.mxu0 0
        %1266 = vmatprep.subr.bf16.mxu0 0
        %1267 = vmatpush1.bf16.msra.mxu0 0
        %1268 = vmatprep.subr.bf16.mxu0 0
        %1269 = vmatpush1.bf16.msra.mxu0 0
        %1270 = vmatprep.subr.bf16.mxu0 0
        %1271 = vmatpush1.bf16.msra.mxu0 0
        %1272 = vmatprep.subr.bf16.mxu0 0
        %1273 = vmatpush1.bf16.msra.mxu0 0
        %1274 = vmatprep.subr.bf16.mxu0 0
        %1275 = vmatpush1.bf16.msra.mxu0 0
        %1276 = vmatprep.subr.bf16.mxu0 0
        %1277 = vmatpush1.bf16.msra.mxu0 0
        %1278 = vmatprep.subr.bf16.mxu0 0
        %1279 = vmatpush1.bf16.msra.mxu0 0
        %1280 = vmatprep.subr.bf16.mxu0 0
        %1281 = vmatpush1.bf16.msra.mxu0 0
        %1282 = vmatprep.subr.bf16.mxu0 0
        %1283 = vmatpush1.bf16.msra.mxu0 0
        %1284 = vmatprep.subr.bf16.mxu0 0
        %1285 = vmatpush1.bf16.msra.mxu0 0
        %1286 = vmatprep.subr.bf16.mxu0 0
        %1287 = vmatpush1.bf16.msra.mxu0 0
        %1288 = vmatprep.subr.bf16.mxu0 0
        %1289 = vmatpush1.bf16.msra.mxu0 0
        %1290 = vmatprep.mubr.bf16.mxu0 0
        %1291 = vmatmul.mubr.bf16.gmra.mrb[0].mxu0 %v1244
        %v1292 = vpop.f32.mrb[0].mxu0
        %v1293 = vadd.f32 0.0, %v1292
        %v1294 = vpop.f32.mrb[0].mxu0
        %v1295 = vpop.f32.mrb[0].mxu0
        %v1296 = vadd.f32 0.0, %v1295
        %v1297 = vpop.f32.mrb[0].mxu0
        %1298 = vmatprep.mubr.bf16.mxu0 0
        %1299 = vmatmul.mubr.bf16.gmra.mrb[0].mxu0 %v1247
        %v1300 = vpop.f32.mrb[0].mxu0
        %v1301 = vadd.f32 0.0, %v1300
        %v1302 = vpop.f32.mrb[0].mxu0
        %v1303 = vpop.f32.mrb[0].mxu0
        %v1304 = vadd.f32 0.0, %v1303
        %v1305 = vpop.f32.mrb[0].mxu0
        %1306 = vmatprep.mubr.bf16.mxu0 0
        %1307 = vmatmul.mubr.bf16.gmra.mrb[0].mxu0 %v1250
        %v1308 = vpop.f32.mrb[0].mxu0
        %v1309 = vadd.f32 0.0, %v1308
        %v1310 = vpop.f32.mrb[0].mxu0
        %v1311 = vpop.f32.mrb[0].mxu0
        %v1312 = vadd.f32 0.0, %v1311
        %v1313 = vpop.f32.mrb[0].mxu0
        %1314 = vmatprep.mubr.bf16.mxu0 0
        %1315 = vmatmul.mubr.bf16.gmra.mrb[0].mxu0 %v1253
        %v1316 = vpop.f32.mrb[0].mxu0
        %v1317 = vadd.f32 0.0, %v1316
        %v1318 = vpop.f32.mrb[0].mxu0
        %v1319 = vpop.f32.mrb[0].mxu0
        %v1320 = vadd.f32 0.0, %v1319
        %v1321 = vpop.f32.mrb[0].mxu0
        %1322 = vdwg.mxu0
        %v1323 = vadd.f32 %v1213, %v1293
        %v1324 = vadd.f32 %v1214, %v1296
        %v1325 = vadd.f32 %v1215, %v1301
        %v1326 = vadd.f32 %v1216, %v1304
        %v1327 = vadd.f32 %v1217, %v1309
        %v1328 = vadd.f32 %v1218, %v1312
        %v1329 = vadd.f32 %v1219, %v1317
        %v1330 = vadd.f32 %v1220, %v1320
        %s1331 = scalar_lea.vmem [#allocation2], 48
        %v1332 = vld [vmem:[%s1331] ss:$2 sm:$0xff]
        %s1333 = scalar_lea.vmem %s1331, 48 [#allocation2]
        %v1334 = vld [vmem:[%s1333] ss:$2 sm:$0xff]
        %s1335 = scalar_lea.vmem %s1331, 96 [#allocation2]
        %v1336 = vld [vmem:[%s1335] ss:$2 sm:$0xff]
        %s1337 = scalar_lea.vmem %s1331, 144 [#allocation2]
        %v1338 = vld [vmem:[%s1337] ss:$2 sm:$0xff]
        %s1339 = scalar_lea.vmem %s1331, 192 [#allocation2]
        %v1340 = vld [vmem:[%s1339] ss:$2 sm:$0xff]
        %s1341 = scalar_lea.vmem %s1331, 240 [#allocation2]
        %v1342 = vld [vmem:[%s1341] ss:$2 sm:$0xff]
        %s1343 = scalar_lea.vmem %s1331, 288 [#allocation2]
        %v1344 = vld [vmem:[%s1343] ss:$2 sm:$0xff]
        %s1345 = scalar_lea.vmem %s1331, 336 [#allocation2]
        %v1346 = vld [vmem:[%s1345] ss:$2 sm:$0xff]
        %v1347 = vpack.c.bf16 %v1334, %v1332
        %v1348 = vpack.c.bf16 %v1338, %v1336
        %v1349 = vpack.c.bf16 %v1342, %v1340
        %v1350 = vpack.c.bf16 %v1346, %v1344
        %s1351 = scalar_lea.vmem %s3, 24
        %v1352 = vld [vmem:[%s1351] sm:$0xf]
        %v1354 = vsel %vm610, %v1347, 0
        %v1357 = vsel %vm610, %v1348, 0
        %v1360 = vsel %vm610, %v1349, 0
        %v1363 = vsel %vm610, %v1350, 0
        %v1366 = vsel %vm743, %v1352, 0
        %1368 = vmatprep.subr.bf16.mxu0 0
        %1369 = vmatpush1.bf16.msra.mxu0 %v1366
        %1370 = vmatprep.subr.bf16.mxu0 0
        %1371 = vmatpush1.bf16.msra.mxu0 0
        %1372 = vmatprep.subr.bf16.mxu0 0
        %1373 = vmatpush1.bf16.msra.mxu0 0
        %1374 = vmatprep.subr.bf16.mxu0 0
        %1375 = vmatpush1.bf16.msra.mxu0 0
        %1376 = vmatprep.subr.bf16.mxu0 0
        %1377 = vmatpush1.bf16.msra.mxu0 0
        %1378 = vmatprep.subr.bf16.mxu0 0
        %1379 = vmatpush1.bf16.msra.mxu0 0
        %1380 = vmatprep.subr.bf16.mxu0 0
        %1381 = vmatpush1.bf16.msra.mxu0 0
        %1382 = vmatprep.subr.bf16.mxu0 0
        %1383 = vmatpush1.bf16.msra.mxu0 0
        %1384 = vmatprep.subr.bf16.mxu0 0
        %1385 = vmatpush1.bf16.msra.mxu0 0
        %1386 = vmatprep.subr.bf16.mxu0 0
        %1387 = vmatpush1.bf16.msra.mxu0 0
        %1388 = vmatprep.subr.bf16.mxu0 0
        %1389 = vmatpush1.bf16.msra.mxu0 0
        %1390 = vmatprep.subr.bf16.mxu0 0
        %1391 = vmatpush1.bf16.msra.mxu0 0
        %1392 = vmatprep.subr.bf16.mxu0 0
        %1393 = vmatpush1.bf16.msra.mxu0 0
        %1394 = vmatprep.subr.bf16.mxu0 0
        %1395 = vmatpush1.bf16.msra.mxu0 0
        %1396 = vmatprep.subr.bf16.mxu0 0
        %1397 = vmatpush1.bf16.msra.mxu0 0
        %1398 = vmatprep.subr.bf16.mxu0 0
        %1399 = vmatpush1.bf16.msra.mxu0 0
        %1400 = vmatprep.mubr.bf16.mxu0 0
        %1401 = vmatmul.mubr.bf16.gmra.mrb[0].mxu0 %v1354
        %v1402 = vpop.f32.mrb[0].mxu0
        %v1403 = vadd.f32 0.0, %v1402
        %v1404 = vpop.f32.mrb[0].mxu0
        %v1405 = vpop.f32.mrb[0].mxu0
        %v1406 = vadd.f32 0.0, %v1405
        %v1407 = vpop.f32.mrb[0].mxu0
        %1408 = vmatprep.mubr.bf16.mxu0 0
        %1409 = vmatmul.mubr.bf16.gmra.mrb[0].mxu0 %v1357
        %v1410 = vpop.f32.mrb[0].mxu0
        %v1411 = vadd.f32 0.0, %v1410
        %v1412 = vpop.f32.mrb[0].mxu0
        %v1413 = vpop.f32.mrb[0].mxu0
        %v1414 = vadd.f32 0.0, %v1413
        %v1415 = vpop.f32.mrb[0].mxu0
        %1416 = vmatprep.mubr.bf16.mxu0 0
        %1417 = vmatmul.mubr.bf16.gmra.mrb[0].mxu0 %v1360
        %v1418 = vpop.f32.mrb[0].mxu0
        %v1419 = vadd.f32 0.0, %v1418
        %v1420 = vpop.f32.mrb[0].mxu0
        %v1421 = vpop.f32.mrb[0].mxu0
        %v1422 = vadd.f32 0.0, %v1421
        %v1423 = vpop.f32.mrb[0].mxu0
        %1424 = vmatprep.mubr.bf16.mxu0 0
        %1425 = vmatmul.mubr.bf16.gmra.mrb[0].mxu0 %v1363
        %v1426 = vpop.f32.mrb[0].mxu0
        %v1427 = vadd.f32 0.0, %v1426
        %v1428 = vpop.f32.mrb[0].mxu0
        %v1429 = vpop.f32.mrb[0].mxu0
        %v1430 = vadd.f32 0.0, %v1429
        %v1431 = vpop.f32.mrb[0].mxu0
        %1432 = vdwg.mxu0
        %v1433 = vadd.f32 %v1323, %v1403
        %v1434 = vadd.f32 %v1324, %v1406
        %v1435 = vadd.f32 %v1325, %v1411
        %v1436 = vadd.f32 %v1326, %v1414
        %v1437 = vadd.f32 %v1327, %v1419
        %v1438 = vadd.f32 %v1328, %v1422
        %v1439 = vadd.f32 %v1329, %v1427
        %v1440 = vadd.f32 %v1330, %v1430
        %s1441 = scalar_lea.vmem %s1331, 1 [#allocation2]
        %v1442 = vld [vmem:[%s1441] ss:$2 sm:$0xff]
        %s1443 = scalar_lea.vmem %s1331, 49 [#allocation2]
        %v1444 = vld [vmem:[%s1443] ss:$2 sm:$0xff]
        %s1445 = scalar_lea.vmem %s1331, 97 [#allocation2]
        %v1446 = vld [vmem:[%s1445] ss:$2 sm:$0xff]
        %s1447 = scalar_lea.vmem %s1331, 145 [#allocation2]
        %v1448 = vld [vmem:[%s1447] ss:$2 sm:$0xff]
        %s1449 = scalar_lea.vmem %s1331, 193 [#allocation2]
        %v1450 = vld [vmem:[%s1449] ss:$2 sm:$0xff]
        %s1451 = scalar_lea.vmem %s1331, 241 [#allocation2]
        %v1452 = vld [vmem:[%s1451] ss:$2 sm:$0xff]
        %s1453 = scalar_lea.vmem %s1331, 289 [#allocation2]
        %v1454 = vld [vmem:[%s1453] ss:$2 sm:$0xff]
        %s1455 = scalar_lea.vmem %s1331, 337 [#allocation2]
        %v1456 = vld [vmem:[%s1455] ss:$2 sm:$0xff]
        %v1457 = vpack.c.bf16 %v1444, %v1442
        %v1458 = vpack.c.bf16 %v1448, %v1446
        %v1459 = vpack.c.bf16 %v1452, %v1450
        %v1460 = vpack.c.bf16 %v1456, %v1454
        %s1461 = scalar_lea.vmem %s3, 28
        %v1462 = vld [vmem:[%s1461] sm:$0xf]
        %v1464 = vsel %vm610, %v1457, 0
        %v1467 = vsel %vm610, %v1458, 0
        %v1470 = vsel %vm610, %v1459, 0
        %v1473 = vsel %vm610, %v1460, 0
        %v1476 = vsel %vm743, %v1462, 0
        %1478 = vmatprep.subr.bf16.mxu0 0
        %1479 = vmatpush1.bf16.msra.mxu0 %v1476
        %1480 = vmatprep.subr.bf16.mxu0 0
        %1481 = vmatpush1.bf16.msra.mxu0 0
        %1482 = vmatprep.subr.bf16.mxu0 0
        %1483 = vmatpush1.bf16.msra.mxu0 0
        %1484 = vmatprep.subr.bf16.mxu0 0
        %1485 = vmatpush1.bf16.msra.mxu0 0
        %1486 = vmatprep.subr.bf16.mxu0 0
        %1487 = vmatpush1.bf16.msra.mxu0 0
        %1488 = vmatprep.subr.bf16.mxu0 0
        %1489 = vmatpush1.bf16.msra.mxu0 0
        %1490 = vmatprep.subr.bf16.mxu0 0
        %1491 = vmatpush1.bf16.msra.mxu0 0
        %1492 = vmatprep.subr.bf16.mxu0 0
        %1493 = vmatpush1.bf16.msra.mxu0 0
        %1494 = vmatprep.subr.bf16.mxu0 0
        %1495 = vmatpush1.bf16.msra.mxu0 0
        %1496 = vmatprep.subr.bf16.mxu0 0
        %1497 = vmatpush1.bf16.msra.mxu0 0
        %1498 = vmatprep.subr.bf16.mxu0 0
        %1499 = vmatpush1.bf16.msra.mxu0 0
        %1500 = vmatprep.subr.bf16.mxu0 0
        %1501 = vmatpush1.bf16.msra.mxu0 0
        %1502 = vmatprep.subr.bf16.mxu0 0
        %1503 = vmatpush1.bf16.msra.mxu0 0
        %1504 = vmatprep.subr.bf16.mxu0 0
        %1505 = vmatpush1.bf16.msra.mxu0 0
        %1506 = vmatprep.subr.bf16.mxu0 0
        %1507 = vmatpush1.bf16.msra.mxu0 0
        %1508 = vmatprep.subr.bf16.mxu0 0
        %1509 = vmatpush1.bf16.msra.mxu0 0
        %1510 = vmatprep.mubr.bf16.mxu0 0
        %1511 = vmatmul.mubr.bf16.gmra.mrb[0].mxu0 %v1464
        %v1512 = vpop.f32.mrb[0].mxu0
        %v1513 = vadd.f32 0.0, %v1512
        %v1514 = vpop.f32.mrb[0].mxu0
        %v1515 = vpop.f32.mrb[0].mxu0
        %v1516 = vadd.f32 0.0, %v1515
        %v1517 = vpop.f32.mrb[0].mxu0
        %1518 = vmatprep.mubr.bf16.mxu0 0
        %1519 = vmatmul.mubr.bf16.gmra.mrb[0].mxu0 %v1467
        %v1520 = vpop.f32.mrb[0].mxu0
        %v1521 = vadd.f32 0.0, %v1520
        %v1522 = vpop.f32.mrb[0].mxu0
        %v1523 = vpop.f32.mrb[0].mxu0
        %v1524 = vadd.f32 0.0, %v1523
        %v1525 = vpop.f32.mrb[0].mxu0
        %1526 = vmatprep.mubr.bf16.mxu0 0
        %1527 = vmatmul.mubr.bf16.gmra.mrb[0].mxu0 %v1470
        %v1528 = vpop.f32.mrb[0].mxu0
        %v1529 = vadd.f32 0.0, %v1528
        %v1530 = vpop.f32.mrb[0].mxu0
        %v1531 = vpop.f32.mrb[0].mxu0
        %v1532 = vadd.f32 0.0, %v1531
        %v1533 = vpop.f32.mrb[0].mxu0
        %1534 = vmatprep.mubr.bf16.mxu0 0
        %1535 = vmatmul.mubr.bf16.gmra.mrb[0].mxu0 %v1473
        %v1536 = vpop.f32.mrb[0].mxu0
        %v1537 = vadd.f32 0.0, %v1536
        %v1538 = vpop.f32.mrb[0].mxu0
        %v1539 = vpop.f32.mrb[0].mxu0
        %v1540 = vadd.f32 0.0, %v1539
        %v1541 = vpop.f32.mrb[0].mxu0
        %1542 = vdwg.mxu0
        %v1543 = vadd.f32 %v1433, %v1513
        %v1544 = vadd.f32 %v1434, %v1516
        %v1545 = vadd.f32 %v1435, %v1521
        %v1546 = vadd.f32 %v1436, %v1524
        %v1547 = vadd.f32 %v1437, %v1529
        %v1548 = vadd.f32 %v1438, %v1532
        %v1549 = vadd.f32 %v1439, %v1537
        %v1550 = vadd.f32 %v1440, %v1540
        %s1551 = scalar_lea.vmem %s1331, 2 [#allocation2]
        %v1552 = vld [vmem:[%s1551] ss:$2 sm:$0xff]
        %s1553 = scalar_lea.vmem %s1331, 50 [#allocation2]
        %v1554 = vld [vmem:[%s1553] ss:$2 sm:$0xff]
        %s1555 = scalar_lea.vmem %s1331, 98 [#allocation2]
        %v1556 = vld [vmem:[%s1555] ss:$2 sm:$0xff]
        %s1557 = scalar_lea.vmem %s1331, 146 [#allocation2]
        %v1558 = vld [vmem:[%s1557] ss:$2 sm:$0xff]
        %s1559 = scalar_lea.vmem %s1331, 194 [#allocation2]
        %v1560 = vld [vmem:[%s1559] ss:$2 sm:$0xff]
        %s1561 = scalar_lea.vmem %s1331, 242 [#allocation2]
        %v1562 = vld [vmem:[%s1561] ss:$2 sm:$0xff]
        %s1563 = scalar_lea.vmem %s1331, 290 [#allocation2]
        %v1564 = vld [vmem:[%s1563] ss:$2 sm:$0xff]
        %s1565 = scalar_lea.vmem %s1331, 338 [#allocation2]
        %v1566 = vld [vmem:[%s1565] ss:$2 sm:$0xff]
        %v1567 = vpack.c.bf16 %v1554, %v1552
        %v1568 = vpack.c.bf16 %v1558, %v1556
        %v1569 = vpack.c.bf16 %v1562, %v1560
        %v1570 = vpack.c.bf16 %v1566, %v1564
        %s1571 = scalar_lea.vmem %s3, 32
        %v1572 = vld [vmem:[%s1571] sm:$0xf]
        %v1574 = vsel %vm610, %v1567, 0
        %v1577 = vsel %vm610, %v1568, 0
        %v1580 = vsel %vm610, %v1569, 0
        %v1583 = vsel %vm610, %v1570, 0
        %v1586 = vsel %vm743, %v1572, 0
        %1588 = vmatprep.subr.bf16.mxu0 0
        %1589 = vmatpush1.bf16.msra.mxu0 %v1586
        %1590 = vmatprep.subr.bf16.mxu0 0
        %1591 = vmatpush1.bf16.msra.mxu0 0
        %1592 = vmatprep.subr.bf16.mxu0 0
        %1593 = vmatpush1.bf16.msra.mxu0 0
        %1594 = vmatprep.subr.bf16.mxu0 0
        %1595 = vmatpush1.bf16.msra.mxu0 0
        %1596 = vmatprep.subr.bf16.mxu0 0
        %1597 = vmatpush1.bf16.msra.mxu0 0
        %1598 = vmatprep.subr.bf16.mxu0 0
        %1599 = vmatpush1.bf16.msra.mxu0 0
        %1600 = vmatprep.subr.bf16.mxu0 0
        %1601 = vmatpush1.bf16.msra.mxu0 0
        %1602 = vmatprep.subr.bf16.mxu0 0
        %1603 = vmatpush1.bf16.msra.mxu0 0
        %1604 = vmatprep.subr.bf16.mxu0 0
        %1605 = vmatpush1.bf16.msra.mxu0 0
        %1606 = vmatprep.subr.bf16.mxu0 0
        %1607 = vmatpush1.bf16.msra.mxu0 0
        %1608 = vmatprep.subr.bf16.mxu0 0
        %1609 = vmatpush1.bf16.msra.mxu0 0
        %1610 = vmatprep.subr.bf16.mxu0 0
        %1611 = vmatpush1.bf16.msra.mxu0 0
        %1612 = vmatprep.subr.bf16.mxu0 0
        %1613 = vmatpush1.bf16.msra.mxu0 0
        %1614 = vmatprep.subr.bf16.mxu0 0
        %1615 = vmatpush1.bf16.msra.mxu0 0
        %1616 = vmatprep.subr.bf16.mxu0 0
        %1617 = vmatpush1.bf16.msra.mxu0 0
        %1618 = vmatprep.subr.bf16.mxu0 0
        %1619 = vmatpush1.bf16.msra.mxu0 0
        %1620 = vmatprep.mubr.bf16.mxu0 0
        %1621 = vmatmul.mubr.bf16.gmra.mrb[0].mxu0 %v1574
        %v1622 = vpop.f32.mrb[0].mxu0
        %v1623 = vadd.f32 0.0, %v1622
        %v1624 = vpop.f32.mrb[0].mxu0
        %v1625 = vpop.f32.mrb[0].mxu0
        %v1626 = vadd.f32 0.0, %v1625
        %v1627 = vpop.f32.mrb[0].mxu0
        %1628 = vmatprep.mubr.bf16.mxu0 0
        %1629 = vmatmul.mubr.bf16.gmra.mrb[0].mxu0 %v1577
        %v1630 = vpop.f32.mrb[0].mxu0
        %v1631 = vadd.f32 0.0, %v1630
        %v1632 = vpop.f32.mrb[0].mxu0
        %v1633 = vpop.f32.mrb[0].mxu0
        %v1634 = vadd.f32 0.0, %v1633
        %v1635 = vpop.f32.mrb[0].mxu0
        %1636 = vmatprep.mubr.bf16.mxu0 0
        %1637 = vmatmul.mubr.bf16.gmra.mrb[0].mxu0 %v1580
        %v1638 = vpop.f32.mrb[0].mxu0
        %v1639 = vadd.f32 0.0, %v1638
        %v1640 = vpop.f32.mrb[0].mxu0
        %v1641 = vpop.f32.mrb[0].mxu0
        %v1642 = vadd.f32 0.0, %v1641
        %v1643 = vpop.f32.mrb[0].mxu0
        %1644 = vmatprep.mubr.bf16.mxu0 0
        %1645 = vmatmul.mubr.bf16.gmra.mrb[0].mxu0 %v1583
        %v1646 = vpop.f32.mrb[0].mxu0
        %v1647 = vadd.f32 0.0, %v1646
        %v1648 = vpop.f32.mrb[0].mxu0
        %v1649 = vpop.f32.mrb[0].mxu0
        %v1650 = vadd.f32 0.0, %v1649
        %v1651 = vpop.f32.mrb[0].mxu0
        %1652 = vdwg.mxu0
        %v1653 = vadd.f32 %v1543, %v1623
        %v1654 = vadd.f32 %v1544, %v1626
        %v1655 = vadd.f32 %v1545, %v1631
        %v1656 = vadd.f32 %v1546, %v1634
        %v1657 = vadd.f32 %v1547, %v1639
        %v1658 = vadd.f32 %v1548, %v1642
        %v1659 = vadd.f32 %v1549, %v1647
        %v1660 = vadd.f32 %v1550, %v1650
        %v1661 = vld [vmem:[%s4] sm:$0x1]
        %v1663 = vlaneseq
        %v1664 = vshrl.u32 %v1663, 7
        %v1665 = vsub.s32 0, %v1664
        %v1666 = vrot.slane %v1661, %v1665
        %v1668 = vadd.f32 %v1653, %v1666
        %v1669 = vadd.f32 %v1654, %v1666
        %v1670 = vadd.f32 %v1655, %v1666
        %v1671 = vadd.f32 %v1656, %v1666
        %v1672 = vadd.f32 %v1657, %v1666
        %v1673 = vadd.f32 %v1658, %v1666
        %v1674 = vadd.f32 %v1659, %v1666
        %v1675 = vadd.f32 %v1660, %v1666
        %v1676 = vmax.f32 %v1668, 0.0
        %v1677 = vmax.f32 %v1669, 0.0
        %v1678 = vmax.f32 %v1670, 0.0
        %v1679 = vmax.f32 %v1671, 0.0
        %v1680 = vmax.f32 %v1672, 0.0
        %v1681 = vmax.f32 %v1673, 0.0
        %v1682 = vmax.f32 %v1674, 0.0
        %v1683 = vmax.f32 %v1675, 0.0
        %v1684 = vpack.c.bf16 %v1677, %v1676
        %v1685 = vpack.c.bf16 %v1679, %v1678
        %v1686 = vpack.c.bf16 %v1681, %v1680
        %v1687 = vpack.c.bf16 %v1683, %v1682
        %v1688 = vld [vmem:[%s5] sm:$0xf]
        %v1689 = vld [vmem:[%s303] ss:$2 sm:$0xff]
        %s1690 = scalar_lea.vmem %s303, 32
        %v1691 = vld [vmem:[%s1690] ss:$2 sm:$0xff]
        %s1692 = scalar_lea.vmem %s303, 64
        %v1693 = vld [vmem:[%s1692] ss:$2 sm:$0xff]
        %s1694 = scalar_lea.vmem %s303, 96
        %v1695 = vld [vmem:[%s1694] ss:$2 sm:$0xff]
        %s1696 = scalar_lea.vmem %s303, 128
        %v1697 = vld [vmem:[%s1696] ss:$2 sm:$0xff]
        %s1698 = scalar_lea.vmem %s303, 160
        %v1699 = vld [vmem:[%s1698] ss:$2 sm:$0xff]
        %s1700 = scalar_lea.vmem %s303, 192
        %v1701 = vld [vmem:[%s1700] ss:$2 sm:$0xff]
        %s1702 = scalar_lea.vmem %s303, 224
        %v1703 = vld [vmem:[%s1702] ss:$2 sm:$0xff]
        %v1704 = vpack.c.bf16 %v1691, %v1689
        %v1705 = vpack.c.bf16 %v1695, %v1693
        %v1706 = vpack.c.bf16 %v1699, %v1697
        %v1707 = vpack.c.bf16 %v1703, %v1701
        %v1708 = vld [vmem:[%s7] sm:$0xf]
        %v1709 = vld [vmem:[%s7 + $0x4] sm:$0xf]
        %v1712 = vunpack.c.l.b16 %v1708
        %v1713 = vunpack.c.l.b16 %v1709
        %v1714 = vpack.c.b16 %v1713, %v1712
        %v1717 = vsel %vm368, %v1704, 0
        %v1720 = vsel %vm368, %v1705, 0
        %v1723 = vsel %vm368, %v1706, 0
        %v1726 = vsel %vm368, %v1707, 0
        %1728 = vmatprep.subr.bf16.mxu0 0
        %1729 = vmatpush1.bf16.msra.mxu0 %v1714
        %1730 = vmatprep.subr.bf16.mxu0 0
        %1731 = vmatpush1.bf16.msra.mxu0 0
        %1732 = vmatprep.subr.bf16.mxu0 0
        %1733 = vmatpush1.bf16.msra.mxu0 0
        %1734 = vmatprep.subr.bf16.mxu0 0
        %1735 = vmatpush1.bf16.msra.mxu0 0
        %1736 = vmatprep.subr.bf16.mxu0 0
        %1737 = vmatpush1.bf16.msra.mxu0 0
        %1738 = vmatprep.subr.bf16.mxu0 0
        %1739 = vmatpush1.bf16.msra.mxu0 0
        %1740 = vmatprep.subr.bf16.mxu0 0
        %1741 = vmatpush1.bf16.msra.mxu0 0
        %1742 = vmatprep.subr.bf16.mxu0 0
        %1743 = vmatpush1.bf16.msra.mxu0 0
        %1744 = vmatprep.subr.bf16.mxu0 0
        %1745 = vmatpush1.bf16.msra.mxu0 0
        %1746 = vmatprep.subr.bf16.mxu0 0
        %1747 = vmatpush1.bf16.msra.mxu0 0
        %1748 = vmatprep.subr.bf16.mxu0 0
        %1749 = vmatpush1.bf16.msra.mxu0 0
        %1750 = vmatprep.subr.bf16.mxu0 0
        %1751 = vmatpush1.bf16.msra.mxu0 0
        %1752 = vmatprep.subr.bf16.mxu0 0
        %1753 = vmatpush1.bf16.msra.mxu0 0
        %1754 = vmatprep.subr.bf16.mxu0 0
        %1755 = vmatpush1.bf16.msra.mxu0 0
        %1756 = vmatprep.subr.bf16.mxu0 0
        %1757 = vmatpush1.bf16.msra.mxu0 0
        %1758 = vmatprep.subr.bf16.mxu0 0
        %1759 = vmatpush1.bf16.msra.mxu0 0
        %1760 = vmatprep.mubr.bf16.mxu0 0
        %1761 = vmatmul.mubr.bf16.gmra.mrb[0].mxu0 %v1717
        %v1762 = vpop.f32.mrb[0].mxu0
        %v1763 = vadd.f32 0.0, %v1762
        %v1764 = vpop.f32.mrb[0].mxu0
        %v1765 = vpop.f32.mrb[0].mxu0
        %v1766 = vadd.f32 0.0, %v1765
        %v1767 = vpop.f32.mrb[0].mxu0
        %1768 = vmatprep.mubr.bf16.mxu0 0
        %1769 = vmatmul.mubr.bf16.gmra.mrb[0].mxu0 %v1720
        %v1770 = vpop.f32.mrb[0].mxu0
        %v1771 = vadd.f32 0.0, %v1770
        %v1772 = vpop.f32.mrb[0].mxu0
        %v1773 = vpop.f32.mrb[0].mxu0
        %v1774 = vadd.f32 0.0, %v1773
        %v1775 = vpop.f32.mrb[0].mxu0
        %1776 = vmatprep.mubr.bf16.mxu0 0
        %1777 = vmatmul.mubr.bf16.gmra.mrb[0].mxu0 %v1723
        %v1778 = vpop.f32.mrb[0].mxu0
        %v1779 = vadd.f32 0.0, %v1778
        %v1780 = vpop.f32.mrb[0].mxu0
        %v1781 = vpop.f32.mrb[0].mxu0
        %v1782 = vadd.f32 0.0, %v1781
        %v1783 = vpop.f32.mrb[0].mxu0
        %1784 = vmatprep.mubr.bf16.mxu0 0
        %1785 = vmatmul.mubr.bf16.gmra.mrb[0].mxu0 %v1726
        %v1786 = vpop.f32.mrb[0].mxu0
        %v1787 = vadd.f32 0.0, %v1786
        %v1788 = vpop.f32.mrb[0].mxu0
        %v1789 = vpop.f32.mrb[0].mxu0
        %v1790 = vadd.f32 0.0, %v1789
        %v1791 = vpop.f32.mrb[0].mxu0
        %1792 = vdwg.mxu0
        %v1794 = vsel %vm610, %v1684, 0
        %v1797 = vsel %vm610, %v1685, 0
        %v1800 = vsel %vm610, %v1686, 0
        %v1803 = vsel %vm610, %v1687, 0
        %v1806 = vsel %vm743, %v1688, 0
        %1808 = vmatprep.subr.bf16.mxu0 0
        %1809 = vmatpush1.bf16.msra.mxu0 %v1806
        %1810 = vmatprep.subr.bf16.mxu0 0
        %1811 = vmatpush1.bf16.msra.mxu0 0
        %1812 = vmatprep.subr.bf16.mxu0 0
        %1813 = vmatpush1.bf16.msra.mxu0 0
        %1814 = vmatprep.subr.bf16.mxu0 0
        %1815 = vmatpush1.bf16.msra.mxu0 0
        %1816 = vmatprep.subr.bf16.mxu0 0
        %1817 = vmatpush1.bf16.msra.mxu0 0
        %1818 = vmatprep.subr.bf16.mxu0 0
        %1819 = vmatpush1.bf16.msra.mxu0 0
        %1820 = vmatprep.subr.bf16.mxu0 0
        %1821 = vmatpush1.bf16.msra.mxu0 0
        %1822 = vmatprep.subr.bf16.mxu0 0
        %1823 = vmatpush1.bf16.msra.mxu0 0
        %1824 = vmatprep.subr.bf16.mxu0 0
        %1825 = vmatpush1.bf16.msra.mxu0 0
        %1826 = vmatprep.subr.bf16.mxu0 0
        %1827 = vmatpush1.bf16.msra.mxu0 0
        %1828 = vmatprep.subr.bf16.mxu0 0
        %1829 = vmatpush1.bf16.msra.mxu0 0
        %1830 = vmatprep.subr.bf16.mxu0 0
        %1831 = vmatpush1.bf16.msra.mxu0 0
        %1832 = vmatprep.subr.bf16.mxu0 0
        %1833 = vmatpush1.bf16.msra.mxu0 0
        %1834 = vmatprep.subr.bf16.mxu0 0
        %1835 = vmatpush1.bf16.msra.mxu0 0
        %1836 = vmatprep.subr.bf16.mxu0 0
        %1837 = vmatpush1.bf16.msra.mxu0 0
        %1838 = vmatprep.subr.bf16.mxu0 0
        %1839 = vmatpush1.bf16.msra.mxu0 0
        %1840 = vmatprep.mubr.bf16.mxu0 0
        %1841 = vmatmul.mubr.bf16.gmra.mrb[0].mxu0 %v1794
        %v1842 = vpop.f32.mrb[0].mxu0
        %v1843 = vadd.f32 %v1763, %v1842
        %v1844 = vpop.f32.mrb[0].mxu0
        %v1845 = vpop.f32.mrb[0].mxu0
        %v1846 = vadd.f32 %v1766, %v1845
        %v1847 = vpop.f32.mrb[0].mxu0
        %1848 = vmatprep.mubr.bf16.mxu0 0
        %1849 = vmatmul.mubr.bf16.gmra.mrb[0].mxu0 %v1797
        %v1850 = vpop.f32.mrb[0].mxu0
        %v1851 = vadd.f32 %v1771, %v1850
        %v1852 = vpop.f32.mrb[0].mxu0
        %v1853 = vpop.f32.mrb[0].mxu0
        %v1854 = vadd.f32 %v1774, %v1853
        %v1855 = vpop.f32.mrb[0].mxu0
        %1856 = vmatprep.mubr.bf16.mxu0 0
        %1857 = vmatmul.mubr.bf16.gmra.mrb[0].mxu0 %v1800
        %v1858 = vpop.f32.mrb[0].mxu0
        %v1859 = vadd.f32 %v1779, %v1858
        %v1860 = vpop.f32.mrb[0].mxu0
        %v1861 = vpop.f32.mrb[0].mxu0
        %v1862 = vadd.f32 %v1782, %v1861
        %v1863 = vpop.f32.mrb[0].mxu0
        %1864 = vmatprep.mubr.bf16.mxu0 0
        %1865 = vmatmul.mubr.bf16.gmra.mrb[0].mxu0 %v1803
        %v1866 = vpop.f32.mrb[0].mxu0
        %v1867 = vadd.f32 %v1787, %v1866
        %v1868 = vpop.f32.mrb[0].mxu0
        %v1869 = vpop.f32.mrb[0].mxu0
        %v1870 = vadd.f32 %v1790, %v1869
        %v1871 = vpop.f32.mrb[0].mxu0
        %1872 = vdwg.mxu0
        %v1873 = vld [vmem:[%s6] sm:$0x1]
        %v1875 = vlaneseq
        %v1876 = vshrl.u32 %v1875, 7
        %v1877 = vsub.s32 0, %v1876
        %v1878 = vrot.slane %v1873, %v1877
        %v1880 = vadd.f32 %v1843, %v1878
        %v1881 = vadd.f32 %v1846, %v1878
        %v1882 = vadd.f32 %v1851, %v1878
        %v1883 = vadd.f32 %v1854, %v1878
        %v1884 = vadd.f32 %v1859, %v1878
        %v1885 = vadd.f32 %v1862, %v1878
        %v1886 = vadd.f32 %v1867, %v1878
        %v1887 = vadd.f32 %v1870, %v1878
        %v1888 = vmax.f32 %v1880, 0.0
        %v1889 = vmax.f32 %v1881, 0.0
        %v1890 = vmax.f32 %v1882, 0.0
        %v1891 = vmax.f32 %v1883, 0.0
        %v1892 = vmax.f32 %v1884, 0.0
        %v1893 = vmax.f32 %v1885, 0.0
        %v1894 = vmax.f32 %v1886, 0.0
        %v1895 = vmax.f32 %v1887, 0.0
        %vm1896 = vcmask 261120
        %1897 = vst.msk [vmem:[%s298] sm:$0xff] %vm1896, %v1888
        %1898 = vst.msk [vmem:[%s298 + $0x8] sm:$0xff] %vm1896, %v1889
        %1899 = vst.msk [vmem:[%s298 + $0x10] sm:$0xff] %vm1896, %v1890
        %1900 = vst.msk [vmem:[%s298 + $0x18] sm:$0xff] %vm1896, %v1891
        %1901 = vst.msk [vmem:[%s298 + $0x20] sm:$0xff] %vm1896, %v1892
        %1902 = vst.msk [vmem:[%s298 + $0x28] sm:$0xff] %vm1896, %v1893
        %1903 = vst.msk [vmem:[%s298 + $0x30] sm:$0xff] %vm1896, %v1894
        %1904 = vst.msk [vmem:[%s298 + $0x38] sm:$0xff] %vm1896, %v1895
        %s1905 = sand.u32 %s203, 1
        %s1906 = scalar_lea.sflag [#allocation4], %s1905
        %s1907 = sand.u32 %s203, 1
        %s1908 = smul.addr %s1907, 64
        %s1909 = scalar_lea.vmem [#allocation3], %s1908
        // Predicated region
        $region53: #{regnet_unit_forward.1} parent=51 // pred_check
          %p1910 = pneg %p213
        $region54: #{regnet_unit_forward.1} parent=51 // pred_check_branch
          %1912 = sbr.rel (%p1910) target = $region56
        $region55: #{regnet_unit_forward.1} parent=51 // pred_region
          %s1914 = ssub.s32 1024, 1024
          %1915 = vsyncadd %s1906, %s1914
          %s1916 = smul.addr %s22, 8
          %s1917 = smul.addr %s1916, 128
          %s1918 = scalar_lea.hbm %s8, %s1917
          %s1919 = sshll.u32 %s1909, 4
          %s1920 = int_to_ptr.vmem [resolvable:$true] %s1919
          %1925 = dma.vmem_to_hbm [thread:$0]  %s1920, 1024, %s1918, %s1906, 128, 128, 8
        $region56: #{regnet_unit_forward.1} parent=51 // pred_fallthru
          _
      $region52: #{regnet_unit_forward.1} parent=5 // pred_fallthru
        _
      %p1926 = scmp.le.s32.totalorder 2, %s17
      // Predicated region
      $region57: #{regnet_unit_forward.1} parent=5 // pred_check
        %p1927 = pneg %p1926
      $region58: #{regnet_unit_forward.1} parent=5 // pred_check_branch
        %1929 = sbr.rel (%p1927) target = $region60
      $region59: #{regnet_unit_forward.1} parent=5 // pred_region
        %s1930 = ssub.s32 %s17, 2
        // Predicated region
        $region61: #{regnet_unit_forward.1} parent=59 // pred_check
          %p1931 = pneg %p219
        $region62: #{regnet_unit_forward.1} parent=59 // pred_check_branch
          %1933 = sbr.rel (%p1931) target = $region64
        $region63: #{regnet_unit_forward.1} parent=59 // pred_region
          %s1934 = sand.u32 %s204, 1
          %s1935 = scalar_lea.sflag [#allocation4], %s1934
          %s1936 = sand.u32 %s204, 1
          %s1937 = smul.addr %s1936, 64
          %s1938 = scalar_lea.vmem [#allocation3], %s1937
          %1939 = dma.done %s1935, 1024
        $region64: #{regnet_unit_forward.1} parent=59 // pred_fallthru
          _
      $region60: #{regnet_unit_forward.1} parent=5 // pred_fallthru
        _
    $region6: #{regnet_unit_forward.1} parent=1 // loop_footer
      %s21 = sadd.s32 1, %s17
    $region7: #{regnet_unit_forward.1} parent=1 // loop_footer_branch
      %16 = sbr.rel target = $region3
    $region8: #{regnet_unit_forward.1} parent=1 // loop_exit
      _
    %1940 = vsyncpa [#allocation4], 1
    %s1941 = scalar_lea.sflag [#allocation4], 1
    %1942 = vsyncpa %s1941, 1

</llo_original>
